<compile_context>
chip_gen: v6e
topology: v6e:2x2x1
jax: 0.10.0
libtpu: 0.0.40
codegen_flags: <defaults>
</compile_context>

<pallas_src>
import functools

import jax
import jax.numpy as jnp
from jax.experimental import pallas as pl
from jax.experimental.pallas import tpu as pltpu


def _round_up(x, m):
    return ((x + m - 1) // m) * m


def _conv2d_im2col_kernel(x_ref, w_ref, b_ref, o_ref, *,
                          kh_size, kw_size, dilation, ho, w_full, c_in, k_pad):
    # x_ref: (N, H, W_full + dil*(KW-1), C)   input, zero-padded along W
    # w_ref: (K_pad, O_pad)                   im2col-packed weights (zero-padded)
    # b_ref: (1, O_pad)                       zero-padded bias
    # o_ref: (N*Ho*W_full, O_pad)             lane-dense flat output
    n = x_ref.shape[0]
    m = n * ho * w_full

    # im2col: 9 shifted views, each kept at the full W width so the (N,Ho,W,C)->(M,C)
    # reshape only collapses major (sublane-side) dims; the kh offset is a free major-dim
    # slice and the kw offset is absorbed by the offset load.  Views are packed along the
    # lane axis to form the fused contraction dimension K = KH*KW*C.
    cols = []
    for kh in range(kh_size):
        h0 = kh * dilation
        for kw in range(kw_size):
            w0 = kw * dilation
            piece = x_ref[:, h0:h0 + ho, w0:w0 + w_full, :]      # (N, Ho, W_full, C)
            cols.append(piece.reshape(m, c_in))
    k_real = kh_size * kw_size * c_in
    if k_pad > k_real:
        # Pad K up to a full lane tile (90 -> 128) so the MXU sees an exact (M,128) LHS;
        # the matching weight rows are zero so the result is unchanged.
        cols.append(jnp.zeros((m, k_pad - k_real), dtype=cols[0].dtype))
    patch = jnp.concatenate(cols, axis=-1)                        # (M, K_pad)

    # Single fused MXU matmul + bias, one dense unmasked store.
    acc = jnp.dot(patch, w_ref[...], preferred_element_type=jnp.float32)
    acc = acc + b_ref[...]
    o_ref[...] = acc.astype(o_ref.dtype)


def pack_conv2d_params(weight_ochw, bias_o):
    """One-time repack of Conv2d params into the kernel's im2col layout.

    Hoisted out of the per-call hot path (in a real model this is done at load time):
    OIHW -> (KH*KW*C, O), zero-padded to (128-multiple, 128-multiple).
    """
    O, C, KH, KW = weight_ochw.shape
    k_real = KH * KW * C
    k_pad = _round_up(k_real, 128)
    o_pad = _round_up(O, 128)
    w2d = jnp.transpose(weight_ochw, (2, 3, 1, 0)).reshape(k_real, O)
    w2d = jnp.pad(w2d, ((0, k_pad - k_real), (0, o_pad - O)))
    b2d = jnp.pad(bias_o.reshape(1, O), ((0, 0), (0, o_pad - O)))
    return w2d, b2d


@functools.partial(jax.jit, static_argnames=("dilation", "kernel_size", "out_channels"))
def conv2d_pallas(x_nchw, w2d, b2d, *, dilation, kernel_size, out_channels):
    """Conv2d forward (stride=1, no padding, dilation). x in PyTorch NCHW; returns NCHW."""
    N, C, H, W = x_nchw.shape
    KH = KW = kernel_size
    O = out_channels
    Ho = H - dilation * (KH - 1)
    Wo = W - dilation * (KW - 1)
    k_pad, o_pad = w2d.shape
    wpad = dilation * (KW - 1)

    # Layout plumbing (fused by XLA under this jit): NCHW -> NHWC plus a zero pad along W
    # so every kernel tap can read a full-width window.
    x_nhwc = jnp.transpose(x_nchw, (0, 2, 3, 1))
    x_padded = jnp.pad(x_nhwc, ((0, 0), (0, 0), (0, wpad), (0, 0)))

    M = N * Ho * W
    kernel = functools.partial(
        _conv2d_im2col_kernel,
        kh_size=KH, kw_size=KW, dilation=dilation,
        ho=Ho, w_full=W, c_in=C, k_pad=k_pad)

    out_flat = pl.pallas_call(
        kernel,
        out_shape=jax.ShapeDtypeStruct((M, o_pad), x_nchw.dtype),
        grid_spec=pltpu.PrefetchScalarGridSpec(
            num_scalar_prefetch=0,
            grid=(1,),  # whole problem fits VMEM on every generation; one step, no per-step overhead
            in_specs=[
                pl.BlockSpec((N, H, W + wpad, C), lambda i: (0, 0, 0, 0)),
                pl.BlockSpec((k_pad, o_pad), lambda i: (0, 0)),
                pl.BlockSpec((1, o_pad), lambda i: (0, 0)),
            ],
            out_specs=pl.BlockSpec((M, o_pad), lambda i: (0, 0)),
        ),
        compiler_params=pltpu.CompilerParams(
            dimension_semantics=("arbitrary",)),
    )(x_padded, w2d, b2d)

    # Drop padded output lanes / junk W columns, back to PyTorch NCHW (small array).
    out = out_flat.reshape(N, Ho, W, o_pad)[:, :, :Wo, :O]
    return jnp.transpose(out, (0, 3, 1, 2))


if __name__ == "__main__":
    # Module defaults: inp=10, out=16, kernel_size=3, bias=True; the test exercises dilation.
    inp, out_ch, ksize, dilation = 10, 16, 3, 2
    N, H, W = 2, 16, 16

    key = jax.random.PRNGKey(0)
    kx, kw_, kb = jax.random.split(key, 3)

    # Deterministic PyTorch-style init (uniform bound 1/sqrt(fan_in)).
    fan_in = inp * ksize * ksize
    bound = 1.0 / (fan_in ** 0.5)
    x = jax.random.normal(kx, (N, inp, H, W), dtype=jnp.float32)
    weight = jax.random.uniform(kw_, (out_ch, inp, ksize, ksize),
                                minval=-bound, maxval=bound, dtype=jnp.float32)
    bias = jax.random.uniform(kb, (out_ch,), minval=-bound, maxval=bound,
                              dtype=jnp.float32)

    # One-time param repack (outside the hot path), then the Pallas conv.
    w2d, b2d = pack_conv2d_params(weight, bias)
    y = conv2d_pallas(x, w2d, b2d, dilation=dilation,
                      kernel_size=ksize, out_channels=out_ch)
    jax.block_until_ready(y)

    # Reference check: XLA conv with the same semantics as torch.nn.Conv2d (valid padding).
    y_ref = jax.lax.conv_general_dilated(
        x, weight, window_strides=(1, 1), padding="VALID",
        rhs_dilation=(dilation, dilation),
        dimension_numbers=("NCHW", "OIHW", "NCHW"),
    ) + bias.reshape(1, out_ch, 1, 1)
    assert y.shape == y_ref.shape, (y.shape, y_ref.shape)
    assert jnp.max(jnp.abs(y - y_ref)) < 1e-4

    print("KERNEL_OK")
</pallas_src>

<mosaic_0001>
module attributes {stable_mosaic.version = 11 : i64} {
  func.func @_conv2d_im2col_kernel(%arg0: i32, %arg1: memref<2x16x20x10xf32, #tpu.memory_space<vmem>>, %arg2: memref<128x128xf32, #tpu.memory_space<vmem>>, %arg3: memref<1x128xf32, #tpu.memory_space<vmem>>, %arg4: memref<384x128xf32, #tpu.memory_space<vmem>>) attributes {dimension_semantics = [#tpu.dimension_semantics<arbitrary>], iteration_bounds = array<i64: 1>, scalar_prefetch = 0 : i64, scratch_operands = 0 : i64, tpu.core_type = #tpu.core_type<tc>, window_params = [{pipeline_mode = #tpu.pipeline_mode<synchronous>, transform_indices = @transform_0, window_bounds = array<i64: 2, 16, 20, 10>}, {pipeline_mode = #tpu.pipeline_mode<synchronous>, transform_indices = @transform_1, window_bounds = array<i64: 128, 128>}, {pipeline_mode = #tpu.pipeline_mode<synchronous>, transform_indices = @transform_2, window_bounds = array<i64: 1, 128>}, {pipeline_mode = #tpu.pipeline_mode<synchronous>, transform_indices = @transform_3, window_bounds = array<i64: 384, 128>}]} {
    %c0 = arith.constant 0 : index
    %c0_0 = arith.constant 0 : index
    %c0_1 = arith.constant 0 : index
    %c0_2 = arith.constant 0 : index
    %0 = vector.load %arg1[%c0, %c0_0, %c0_1, %c0_2] : memref<2x16x20x10xf32, #tpu.memory_space<vmem>>, vector<2x12x16x10xf32>
    %1 = vector.shape_cast %0 : vector<2x12x16x10xf32> to vector<384x10xf32>
    %c0_3 = arith.constant 0 : index
    %c0_4 = arith.constant 0 : index
    %c2 = arith.constant 2 : index
    %c0_5 = arith.constant 0 : index
    %2 = vector.load %arg1[%c0_3, %c0_4, %c2, %c0_5] : memref<2x16x20x10xf32, #tpu.memory_space<vmem>>, vector<2x12x16x10xf32>
    %3 = vector.shape_cast %2 : vector<2x12x16x10xf32> to vector<384x10xf32>
    %c0_6 = arith.constant 0 : index
    %c0_7 = arith.constant 0 : index
    %c4 = arith.constant 4 : index
    %c0_8 = arith.constant 0 : index
    %4 = vector.load %arg1[%c0_6, %c0_7, %c4, %c0_8] : memref<2x16x20x10xf32, #tpu.memory_space<vmem>>, vector<2x12x16x10xf32>
    %5 = vector.shape_cast %4 : vector<2x12x16x10xf32> to vector<384x10xf32>
    %c0_9 = arith.constant 0 : index
    %c2_10 = arith.constant 2 : index
    %c0_11 = arith.constant 0 : index
    %c0_12 = arith.constant 0 : index
    %6 = vector.load %arg1[%c0_9, %c2_10, %c0_11, %c0_12] : memref<2x16x20x10xf32, #tpu.memory_space<vmem>>, vector<2x12x16x10xf32>
    %7 = vector.shape_cast %6 : vector<2x12x16x10xf32> to vector<384x10xf32>
    %c0_13 = arith.constant 0 : index
    %c2_14 = arith.constant 2 : index
    %c2_15 = arith.constant 2 : index
    %c0_16 = arith.constant 0 : index
    %8 = vector.load %arg1[%c0_13, %c2_14, %c2_15, %c0_16] : memref<2x16x20x10xf32, #tpu.memory_space<vmem>>, vector<2x12x16x10xf32>
    %9 = vector.shape_cast %8 : vector<2x12x16x10xf32> to vector<384x10xf32>
    %c0_17 = arith.constant 0 : index
    %c2_18 = arith.constant 2 : index
    %c4_19 = arith.constant 4 : index
    %c0_20 = arith.constant 0 : index
    %10 = vector.load %arg1[%c0_17, %c2_18, %c4_19, %c0_20] : memref<2x16x20x10xf32, #tpu.memory_space<vmem>>, vector<2x12x16x10xf32>
    %11 = vector.shape_cast %10 : vector<2x12x16x10xf32> to vector<384x10xf32>
    %c0_21 = arith.constant 0 : index
    %c4_22 = arith.constant 4 : index
    %c0_23 = arith.constant 0 : index
    %c0_24 = arith.constant 0 : index
    %12 = vector.load %arg1[%c0_21, %c4_22, %c0_23, %c0_24] : memref<2x16x20x10xf32, #tpu.memory_space<vmem>>, vector<2x12x16x10xf32>
    %13 = vector.shape_cast %12 : vector<2x12x16x10xf32> to vector<384x10xf32>
    %c0_25 = arith.constant 0 : index
    %c4_26 = arith.constant 4 : index
    %c2_27 = arith.constant 2 : index
    %c0_28 = arith.constant 0 : index
    %14 = vector.load %arg1[%c0_25, %c4_26, %c2_27, %c0_28] : memref<2x16x20x10xf32, #tpu.memory_space<vmem>>, vector<2x12x16x10xf32>
    %15 = vector.shape_cast %14 : vector<2x12x16x10xf32> to vector<384x10xf32>
    %c0_29 = arith.constant 0 : index
    %c4_30 = arith.constant 4 : index
    %c4_31 = arith.constant 4 : index
    %c0_32 = arith.constant 0 : index
    %16 = vector.load %arg1[%c0_29, %c4_30, %c4_31, %c0_32] : memref<2x16x20x10xf32, #tpu.memory_space<vmem>>, vector<2x12x16x10xf32>
    %17 = vector.shape_cast %16 : vector<2x12x16x10xf32> to vector<384x10xf32>
    %cst = arith.constant 0.000000e+00 : f32
    %18 = vector.broadcast %cst : f32 to vector<384x38xf32>
    %19 = tpu.concatenate %1, %3, %5, %7, %9, %11, %13, %15, %17, %18 in 1 : vector<384x10xf32>, vector<384x10xf32>, vector<384x10xf32>, vector<384x10xf32>, vector<384x10xf32>, vector<384x10xf32>, vector<384x10xf32>, vector<384x10xf32>, vector<384x10xf32>, vector<384x38xf32> -> vector<384x128xf32>
    %c0_33 = arith.constant 0 : index
    %c0_34 = arith.constant 0 : index
    %20 = vector.load %arg2[%c0_33, %c0_34] : memref<128x128xf32, #tpu.memory_space<vmem>>, vector<128x128xf32>
    %cst_35 = arith.constant dense<0.000000e+00> : vector<384x128xf32>
    %21 = tpu.matmul %19, %20, %cst_35 {dimension_numbers = #tpu.dot_dimension_numbers<[1], [0], [0], [1], [0, 0, 1, 1], [], []>} : vector<384x128xf32>, vector<128x128xf32>, vector<384x128xf32> -> vector<384x128xf32>
    %c0_36 = arith.constant 0 : index
    %c0_37 = arith.constant 0 : index
    %22 = vector.load %arg3[%c0_36, %c0_37] : memref<1x128xf32, #tpu.memory_space<vmem>>, vector<1x128xf32>
    %23 = vector.broadcast %22 : vector<1x128xf32> to vector<384x128xf32>
    %24 = arith.addf %21, %23 : vector<384x128xf32>
    %c0_38 = arith.constant 0 : index
    %c0_39 = arith.constant 0 : index
    %25 = vector.load %arg4[%c0_38, %c0_39] : memref<384x128xf32, #tpu.memory_space<vmem>>, vector<384x128xf32>
    tpu.vector_store %arg4[%c0_38, %c0_39], %24 {strides = array<i32>} : memref<384x128xf32, #tpu.memory_space<vmem>>, vector<384x128xf32>,
    return
  }
  func.func @transform_0(%arg0: i32) -> (i32, i32, i32, i32) {
    %c0_i32 = arith.constant 0 : i32
    %c0_i32_0 = arith.constant 0 : i32
    %c0_i32_1 = arith.constant 0 : i32
    %c0_i32_2 = arith.constant 0 : i32
    %c0_i32_3 = arith.constant 0 : i32
    return %c0_i32, %c0_i32_0, %c0_i32_1, %c0_i32_2 : i32, i32, i32, i32
  }
  func.func @transform_1(%arg0: i32) -> (i32, i32) {
    %c0_i32 = arith.constant 0 : i32
    %c0_i32_0 = arith.constant 0 : i32
    %c0_i32_1 = arith.constant 0 : i32
    return %c0_i32, %c0_i32_0 : i32, i32
  }
  func.func @transform_2(%arg0: i32) -> (i32, i32) {
    %c0_i32 = arith.constant 0 : i32
    %c0_i32_0 = arith.constant 0 : i32
    %c0_i32_1 = arith.constant 0 : i32
    return %c0_i32, %c0_i32_0 : i32, i32
  }
  func.func @transform_3(%arg0: i32) -> (i32, i32) {
    %c0_i32 = arith.constant 0 : i32
    %c0_i32_0 = arith.constant 0 : i32
    %c0_i32_1 = arith.constant 0 : i32
    return %c0_i32, %c0_i32_0 : i32, i32
  }
}

</mosaic_0001>

<llo_original>
// kernel: conv2d_pallas.1
$region0: #{conv2d_pallas.1}
  #allocation0 [shape = 'u32[]', space=smem, size = 0x4, offset = 0x4, fixed_abs, tag = 'smem constant byte address 0x4 - core index']
  #allocation1 [shape = 'u32[144,128]{1,0:T(1,128)}', space=vmem, size = 0x12000, scoped, tag = 'internal scratch']
  %s0 = inlined_call_operand.vmem [shape: f32[2,16,20,10], index: 0, kind: input, shape index: {}]
  %s1 = inlined_call_operand.vmem [shape: f32[128,128], index: 1, kind: input, shape index: {}]
  %s2 = inlined_call_operand.vmem [shape: f32[1,128], index: 2, kind: input, shape index: {}]
  %s3 = inlined_call_operand.vmem [shape: f32[384,128], index: 3, kind: output, shape index: {}]
  %s4 = sld [smem:[#allocation0]]
  $region22: #{conv2d_pallas.1} parent=0
    _
  %s6 = ssub.s32 1, %s4
  %s7 = scalar_select 0, %s6, %s4
  // Predicated region
  $region2: #{conv2d_pallas.1} parent=0 // pred_check
    _
  $region3: #{conv2d_pallas.1} parent=0 // pred_check_branch
    %9 = sbr.rel (0) target = $region5
  $region4: #{conv2d_pallas.1} parent=0 // pred_region
    _
  $region5: #{conv2d_pallas.1} parent=0 // pred_fallthru
    _
  // Predicated region
  $region6: #{conv2d_pallas.1} parent=0 // pred_check
    _
  $region7: #{conv2d_pallas.1} parent=0 // pred_check_branch
    %11 = sbr.rel (0) target = $region9
  $region8: #{conv2d_pallas.1} parent=0 // pred_region
    _
  $region9: #{conv2d_pallas.1} parent=0 // pred_fallthru
    _
  // Predicated region
  $region10: #{conv2d_pallas.1} parent=0 // pred_check
    _
  $region11: #{conv2d_pallas.1} parent=0 // pred_check_branch
    %13 = sbr.rel (0) target = $region13
  $region12: #{conv2d_pallas.1} parent=0 // pred_region
    _
  $region13: #{conv2d_pallas.1} parent=0 // pred_fallthru
    _
  %v14 = vld [vmem:[%s0] sm:$0xff]
  %v15 = vld [vmem:[%s0 + $0x8] sm:$0xff]
  %v16 = vld [vmem:[%s0 + $0x18] sm:$0xff]
  %v17 = vld [vmem:[%s0 + $0x20] sm:$0xff]
  %v18 = vld [vmem:[%s0 + $0x30] sm:$0xff]
  %v19 = vld [vmem:[%s0 + $0x38] sm:$0xff]
  %v20 = vld [vmem:[%s0 + $0x48] sm:$0xff]
  %v21 = vld [vmem:[%s0 + $0x50] sm:$0xff]
  %v22 = vld [vmem:[%s0 + $0x60] sm:$0xff]
  %v23 = vld [vmem:[%s0 + $0x68] sm:$0xff]
  %v24 = vld [vmem:[%s0 + $0x78] sm:$0xff]
  %v25 = vld [vmem:[%s0 + $0x80] sm:$0xff]
  %v26 = vld [vmem:[%s0 + $0x90] sm:$0xff]
  %v27 = vld [vmem:[%s0 + $0x98] sm:$0xff]
  %v28 = vld [vmem:[%s0 + $0xa8] sm:$0xff]
  %v29 = vld [vmem:[%s0 + $0xb0] sm:$0xff]
  %v30 = vld [vmem:[%s0 + $0xc0] sm:$0xff]
  %v31 = vld [vmem:[%s0 + $0xc8] sm:$0xff]
  %v32 = vld [vmem:[%s0 + $0xd8] sm:$0xff]
  %v33 = vld [vmem:[%s0 + $0xe0] sm:$0xff]
  %v34 = vld [vmem:[%s0 + $0xf0] sm:$0xff]
  %v35 = vld [vmem:[%s0 + $0xf8] sm:$0xff]
  %v36 = vld [vmem:[%s0 + $0x108] sm:$0xff]
  %v37 = vld [vmem:[%s0 + $0x110] sm:$0xff]
  %v38 = vld [vmem:[%s0 + $0x180] sm:$0xff]
  %v39 = vld [vmem:[%s0 + $0x188] sm:$0xff]
  %v40 = vld [vmem:[%s0 + $0x198] sm:$0xff]
  %v41 = vld [vmem:[%s0 + $0x1a0] sm:$0xff]
  %v42 = vld [vmem:[%s0 + $0x1b0] sm:$0xff]
  %v43 = vld [vmem:[%s0 + $0x1b8] sm:$0xff]
  %v44 = vld [vmem:[%s0 + $0x1c8] sm:$0xff]
  %v45 = vld [vmem:[%s0 + $0x1d0] sm:$0xff]
  %v46 = vld [vmem:[%s0 + $0x1e0] sm:$0xff]
  %v47 = vld [vmem:[%s0 + $0x1e8] sm:$0xff]
  %v48 = vld [vmem:[%s0 + $0x1f8] sm:$0xff]
  %v49 = vld [vmem:[%s0 + $0x200] sm:$0xff]
  %v50 = vld [vmem:[%s0 + $0x210] sm:$0xff]
  %v51 = vld [vmem:[%s0 + $0x218] sm:$0xff]
  %v52 = vld [vmem:[%s0 + $0x228] sm:$0xff]
  %v53 = vld [vmem:[%s0 + $0x230] sm:$0xff]
  %v54 = vld [vmem:[%s0 + $0x240] sm:$0xff]
  %v55 = vld [vmem:[%s0 + $0x248] sm:$0xff]
  %v56 = vld [vmem:[%s0 + $0x258] sm:$0xff]
  %v57 = vld [vmem:[%s0 + $0x260] sm:$0xff]
  %v58 = vld [vmem:[%s0 + $0x270] sm:$0xff]
  %v59 = vld [vmem:[%s0 + $0x278] sm:$0xff]
  %v60 = vld [vmem:[%s0 + $0x288] sm:$0xff]
  %v61 = vld [vmem:[%s0 + $0x290] sm:$0xff]
  %v62 = vld [vmem:[%s0 + $0x2] sm:$0xff]
  %v63 = vld [vmem:[%s0 + $0xa] sm:$0xff]
  %v64 = vld [vmem:[%s0 + $0x1a] sm:$0xff]
  %v65 = vld [vmem:[%s0 + $0x22] sm:$0xff]
  %v66 = vld [vmem:[%s0 + $0x32] sm:$0xff]
  %v67 = vld [vmem:[%s0 + $0x3a] sm:$0xff]
  %v68 = vld [vmem:[%s0 + $0x4a] sm:$0xff]
  %v69 = vld [vmem:[%s0 + $0x52] sm:$0xff]
  %v70 = vld [vmem:[%s0 + $0x62] sm:$0xff]
  %v71 = vld [vmem:[%s0 + $0x6a] sm:$0xff]
  %v72 = vld [vmem:[%s0 + $0x7a] sm:$0xff]
  %v73 = vld [vmem:[%s0 + $0x82] sm:$0xff]
  %v74 = vld [vmem:[%s0 + $0x92] sm:$0xff]
  %v75 = vld [vmem:[%s0 + $0x9a] sm:$0xff]
  %v76 = vld [vmem:[%s0 + $0xaa] sm:$0xff]
  %v77 = vld [vmem:[%s0 + $0xb2] sm:$0xff]
  %v78 = vld [vmem:[%s0 + $0xc2] sm:$0xff]
  %v79 = vld [vmem:[%s0 + $0xca] sm:$0xff]
  %v80 = vld [vmem:[%s0 + $0xda] sm:$0xff]
  %v81 = vld [vmem:[%s0 + $0xe2] sm:$0xff]
  %v82 = vld [vmem:[%s0 + $0xf2] sm:$0xff]
  %v83 = vld [vmem:[%s0 + $0xfa] sm:$0xff]
  %v84 = vld [vmem:[%s0 + $0x10a] sm:$0xff]
  %v85 = vld [vmem:[%s0 + $0x112] sm:$0xff]
  %v86 = vld [vmem:[%s0 + $0x182] sm:$0xff]
  %v87 = vld [vmem:[%s0 + $0x18a] sm:$0xff]
  %v88 = vld [vmem:[%s0 + $0x19a] sm:$0xff]
  %v89 = vld [vmem:[%s0 + $0x1a2] sm:$0xff]
  %v90 = vld [vmem:[%s0 + $0x1b2] sm:$0xff]
  %v91 = vld [vmem:[%s0 + $0x1ba] sm:$0xff]
  %v92 = vld [vmem:[%s0 + $0x1ca] sm:$0xff]
  %v93 = vld [vmem:[%s0 + $0x1d2] sm:$0xff]
  %v94 = vld [vmem:[%s0 + $0x1e2] sm:$0xff]
  %v95 = vld [vmem:[%s0 + $0x1ea] sm:$0xff]
  %v96 = vld [vmem:[%s0 + $0x1fa] sm:$0xff]
  %v97 = vld [vmem:[%s0 + $0x202] sm:$0xff]
  %v98 = vld [vmem:[%s0 + $0x212] sm:$0xff]
  %v99 = vld [vmem:[%s0 + $0x21a] sm:$0xff]
  %v100 = vld [vmem:[%s0 + $0x22a] sm:$0xff]
  %v101 = vld [vmem:[%s0 + $0x232] sm:$0xff]
  %v102 = vld [vmem:[%s0 + $0x242] sm:$0xff]
  %v103 = vld [vmem:[%s0 + $0x24a] sm:$0xff]
  %v104 = vld [vmem:[%s0 + $0x25a] sm:$0xff]
  %v105 = vld [vmem:[%s0 + $0x262] sm:$0xff]
  %v106 = vld [vmem:[%s0 + $0x272] sm:$0xff]
  %v107 = vld [vmem:[%s0 + $0x27a] sm:$0xff]
  %v108 = vld [vmem:[%s0 + $0x28a] sm:$0xff]
  %v109 = vld [vmem:[%s0 + $0x292] sm:$0xff]
  %v110 = vld [vmem:[%s0 + $0x4] sm:$0xff]
  %v111 = vld [vmem:[%s0 + $0xc] sm:$0xff]
  %v112 = vld [vmem:[%s0 + $0x1c] sm:$0xff]
  %v113 = vld [vmem:[%s0 + $0x24] sm:$0xff]
  %v114 = vld [vmem:[%s0 + $0x34] sm:$0xff]
  %v115 = vld [vmem:[%s0 + $0x3c] sm:$0xff]
  %v116 = vld [vmem:[%s0 + $0x4c] sm:$0xff]
  %v117 = vld [vmem:[%s0 + $0x54] sm:$0xff]
  %v118 = vld [vmem:[%s0 + $0x64] sm:$0xff]
  %v119 = vld [vmem:[%s0 + $0x6c] sm:$0xff]
  %v120 = vld [vmem:[%s0 + $0x7c] sm:$0xff]
  %v121 = vld [vmem:[%s0 + $0x84] sm:$0xff]
  %v122 = vld [vmem:[%s0 + $0x94] sm:$0xff]
  %v123 = vld [vmem:[%s0 + $0x9c] sm:$0xff]
  %v124 = vld [vmem:[%s0 + $0xac] sm:$0xff]
  %v125 = vld [vmem:[%s0 + $0xb4] sm:$0xff]
  %v126 = vld [vmem:[%s0 + $0xc4] sm:$0xff]
  %v127 = vld [vmem:[%s0 + $0xcc] sm:$0xff]
  %v128 = vld [vmem:[%s0 + $0xdc] sm:$0xff]
  %v129 = vld [vmem:[%s0 + $0xe4] sm:$0xff]
  %v130 = vld [vmem:[%s0 + $0xf4] sm:$0xff]
  %v131 = vld [vmem:[%s0 + $0xfc] sm:$0xff]
  %v132 = vld [vmem:[%s0 + $0x10c] sm:$0xff]
  %v133 = vld [vmem:[%s0 + $0x114] sm:$0xff]
  %v134 = vld [vmem:[%s0 + $0x184] sm:$0xff]
  %v135 = vld [vmem:[%s0 + $0x18c] sm:$0xff]
  %v136 = vld [vmem:[%s0 + $0x19c] sm:$0xff]
  %v137 = vld [vmem:[%s0 + $0x1a4] sm:$0xff]
  %v138 = vld [vmem:[%s0 + $0x1b4] sm:$0xff]
  %v139 = vld [vmem:[%s0 + $0x1bc] sm:$0xff]
  %v140 = vld [vmem:[%s0 + $0x1cc] sm:$0xff]
  %v141 = vld [vmem:[%s0 + $0x1d4] sm:$0xff]
  %v142 = vld [vmem:[%s0 + $0x1e4] sm:$0xff]
  %v143 = vld [vmem:[%s0 + $0x1ec] sm:$0xff]
  %v144 = vld [vmem:[%s0 + $0x1fc] sm:$0xff]
  %v145 = vld [vmem:[%s0 + $0x204] sm:$0xff]
  %v146 = vld [vmem:[%s0 + $0x214] sm:$0xff]
  %v147 = vld [vmem:[%s0 + $0x21c] sm:$0xff]
  %v148 = vld [vmem:[%s0 + $0x22c] sm:$0xff]
  %v149 = vld [vmem:[%s0 + $0x234] sm:$0xff]
  %v150 = vld [vmem:[%s0 + $0x244] sm:$0xff]
  %v151 = vld [vmem:[%s0 + $0x24c] sm:$0xff]
  %v152 = vld [vmem:[%s0 + $0x25c] sm:$0xff]
  %v153 = vld [vmem:[%s0 + $0x264] sm:$0xff]
  %v154 = vld [vmem:[%s0 + $0x274] sm:$0xff]
  %v155 = vld [vmem:[%s0 + $0x27c] sm:$0xff]
  %v156 = vld [vmem:[%s0 + $0x28c] sm:$0xff]
  %v157 = vld [vmem:[%s0 + $0x294] sm:$0xff]
  %s158 = scalar_lea.vmem %s0, 48
  %v159 = vld [vmem:[%s158] sm:$0xff]
  %v160 = vld [vmem:[%s158 + $0x8] sm:$0xff]
  %v161 = vld [vmem:[%s158 + $0x18] sm:$0xff]
  %v162 = vld [vmem:[%s158 + $0x20] sm:$0xff]
  %v163 = vld [vmem:[%s158 + $0x30] sm:$0xff]
  %v164 = vld [vmem:[%s158 + $0x38] sm:$0xff]
  %v165 = vld [vmem:[%s158 + $0x48] sm:$0xff]
  %v166 = vld [vmem:[%s158 + $0x50] sm:$0xff]
  %v167 = vld [vmem:[%s158 + $0x60] sm:$0xff]
  %v168 = vld [vmem:[%s158 + $0x68] sm:$0xff]
  %v169 = vld [vmem:[%s158 + $0x78] sm:$0xff]
  %v170 = vld [vmem:[%s158 + $0x80] sm:$0xff]
  %v171 = vld [vmem:[%s158 + $0x90] sm:$0xff]
  %v172 = vld [vmem:[%s158 + $0x98] sm:$0xff]
  %v173 = vld [vmem:[%s158 + $0xa8] sm:$0xff]
  %v174 = vld [vmem:[%s158 + $0xb0] sm:$0xff]
  %v175 = vld [vmem:[%s158 + $0xc0] sm:$0xff]
  %v176 = vld [vmem:[%s158 + $0xc8] sm:$0xff]
  %v177 = vld [vmem:[%s158 + $0xd8] sm:$0xff]
  %v178 = vld [vmem:[%s158 + $0xe0] sm:$0xff]
  %v179 = vld [vmem:[%s158 + $0xf0] sm:$0xff]
  %v180 = vld [vmem:[%s158 + $0xf8] sm:$0xff]
  %v181 = vld [vmem:[%s158 + $0x108] sm:$0xff]
  %v182 = vld [vmem:[%s158 + $0x110] sm:$0xff]
  %v183 = vld [vmem:[%s158 + $0x180] sm:$0xff]
  %v184 = vld [vmem:[%s158 + $0x188] sm:$0xff]
  %v185 = vld [vmem:[%s158 + $0x198] sm:$0xff]
  %v186 = vld [vmem:[%s158 + $0x1a0] sm:$0xff]
  %v187 = vld [vmem:[%s158 + $0x1b0] sm:$0xff]
  %v188 = vld [vmem:[%s158 + $0x1b8] sm:$0xff]
  %v189 = vld [vmem:[%s158 + $0x1c8] sm:$0xff]
  %v190 = vld [vmem:[%s158 + $0x1d0] sm:$0xff]
  %v191 = vld [vmem:[%s158 + $0x1e0] sm:$0xff]
  %v192 = vld [vmem:[%s158 + $0x1e8] sm:$0xff]
  %v193 = vld [vmem:[%s158 + $0x1f8] sm:$0xff]
  %v194 = vld [vmem:[%s158 + $0x200] sm:$0xff]
  %v195 = vld [vmem:[%s158 + $0x210] sm:$0xff]
  %v196 = vld [vmem:[%s158 + $0x218] sm:$0xff]
  %v197 = vld [vmem:[%s158 + $0x228] sm:$0xff]
  %v198 = vld [vmem:[%s158 + $0x230] sm:$0xff]
  %v199 = vld [vmem:[%s158 + $0x240] sm:$0xff]
  %v200 = vld [vmem:[%s158 + $0x248] sm:$0xff]
  %v201 = vld [vmem:[%s158 + $0x258] sm:$0xff]
  %v202 = vld [vmem:[%s158 + $0x260] sm:$0xff]
  %v203 = vld [vmem:[%s158 + $0x270] sm:$0xff]
  %v204 = vld [vmem:[%s158 + $0x278] sm:$0xff]
  %v205 = vld [vmem:[%s158 + $0x288] sm:$0xff]
  %v206 = vld [vmem:[%s158 + $0x290] sm:$0xff]
  %v207 = vld [vmem:[%s158 + $0x2] sm:$0xff]
  %v208 = vld [vmem:[%s158 + $0xa] sm:$0xff]
  %v209 = vld [vmem:[%s158 + $0x1a] sm:$0xff]
  %v210 = vld [vmem:[%s158 + $0x22] sm:$0xff]
  %v211 = vld [vmem:[%s158 + $0x32] sm:$0xff]
  %v212 = vld [vmem:[%s158 + $0x3a] sm:$0xff]
  %v213 = vld [vmem:[%s158 + $0x4a] sm:$0xff]
  %v214 = vld [vmem:[%s158 + $0x52] sm:$0xff]
  %v215 = vld [vmem:[%s158 + $0x62] sm:$0xff]
  %v216 = vld [vmem:[%s158 + $0x6a] sm:$0xff]
  %v217 = vld [vmem:[%s158 + $0x7a] sm:$0xff]
  %v218 = vld [vmem:[%s158 + $0x82] sm:$0xff]
  %v219 = vld [vmem:[%s158 + $0x92] sm:$0xff]
  %v220 = vld [vmem:[%s158 + $0x9a] sm:$0xff]
  %v221 = vld [vmem:[%s158 + $0xaa] sm:$0xff]
  %v222 = vld [vmem:[%s158 + $0xb2] sm:$0xff]
  %v223 = vld [vmem:[%s158 + $0xc2] sm:$0xff]
  %v224 = vld [vmem:[%s158 + $0xca] sm:$0xff]
  %v225 = vld [vmem:[%s158 + $0xda] sm:$0xff]
  %v226 = vld [vmem:[%s158 + $0xe2] sm:$0xff]
  %v227 = vld [vmem:[%s158 + $0xf2] sm:$0xff]
  %v228 = vld [vmem:[%s158 + $0xfa] sm:$0xff]
  %v229 = vld [vmem:[%s158 + $0x10a] sm:$0xff]
  %v230 = vld [vmem:[%s158 + $0x112] sm:$0xff]
  %v231 = vld [vmem:[%s158 + $0x182] sm:$0xff]
  %v232 = vld [vmem:[%s158 + $0x18a] sm:$0xff]
  %v233 = vld [vmem:[%s158 + $0x19a] sm:$0xff]
  %v234 = vld [vmem:[%s158 + $0x1a2] sm:$0xff]
  %v235 = vld [vmem:[%s158 + $0x1b2] sm:$0xff]
  %v236 = vld [vmem:[%s158 + $0x1ba] sm:$0xff]
  %v237 = vld [vmem:[%s158 + $0x1ca] sm:$0xff]
  %v238 = vld [vmem:[%s158 + $0x1d2] sm:$0xff]
  %v239 = vld [vmem:[%s158 + $0x1e2] sm:$0xff]
  %v240 = vld [vmem:[%s158 + $0x1ea] sm:$0xff]
  %v241 = vld [vmem:[%s158 + $0x1fa] sm:$0xff]
  %v242 = vld [vmem:[%s158 + $0x202] sm:$0xff]
  %v243 = vld [vmem:[%s158 + $0x212] sm:$0xff]
  %v244 = vld [vmem:[%s158 + $0x21a] sm:$0xff]
  %v245 = vld [vmem:[%s158 + $0x22a] sm:$0xff]
  %v246 = vld [vmem:[%s158 + $0x232] sm:$0xff]
  %v247 = vld [vmem:[%s158 + $0x242] sm:$0xff]
  %v248 = vld [vmem:[%s158 + $0x24a] sm:$0xff]
  %v249 = vld [vmem:[%s158 + $0x25a] sm:$0xff]
  %v250 = vld [vmem:[%s158 + $0x262] sm:$0xff]
  %v251 = vld [vmem:[%s158 + $0x272] sm:$0xff]
  %v252 = vld [vmem:[%s158 + $0x27a] sm:$0xff]
  %v253 = vld [vmem:[%s158 + $0x28a] sm:$0xff]
  %v254 = vld [vmem:[%s158 + $0x292] sm:$0xff]
  %v255 = vld [vmem:[%s158 + $0x4] sm:$0xff]
  %v256 = vld [vmem:[%s158 + $0xc] sm:$0xff]
  %v257 = vld [vmem:[%s158 + $0x1c] sm:$0xff]
  %v258 = vld [vmem:[%s158 + $0x24] sm:$0xff]
  %v259 = vld [vmem:[%s158 + $0x34] sm:$0xff]
  %v260 = vld [vmem:[%s158 + $0x3c] sm:$0xff]
  %v261 = vld [vmem:[%s158 + $0x4c] sm:$0xff]
  %v262 = vld [vmem:[%s158 + $0x54] sm:$0xff]
  %v263 = vld [vmem:[%s158 + $0x64] sm:$0xff]
  %v264 = vld [vmem:[%s158 + $0x6c] sm:$0xff]
  %v265 = vld [vmem:[%s158 + $0x7c] sm:$0xff]
  %v266 = vld [vmem:[%s158 + $0x84] sm:$0xff]
  %v267 = vld [vmem:[%s158 + $0x94] sm:$0xff]
  %v268 = vld [vmem:[%s158 + $0x9c] sm:$0xff]
  %v269 = vld [vmem:[%s158 + $0xac] sm:$0xff]
  %v270 = vld [vmem:[%s158 + $0xb4] sm:$0xff]
  %v271 = vld [vmem:[%s158 + $0xc4] sm:$0xff]
  %v272 = vld [vmem:[%s158 + $0xcc] sm:$0xff]
  %v273 = vld [vmem:[%s158 + $0xdc] sm:$0xff]
  %v274 = vld [vmem:[%s158 + $0xe4] sm:$0xff]
  %v275 = vld [vmem:[%s158 + $0xf4] sm:$0xff]
  %v276 = vld [vmem:[%s158 + $0xfc] sm:$0xff]
  %v277 = vld [vmem:[%s158 + $0x10c] sm:$0xff]
  %v278 = vld [vmem:[%s158 + $0x114] sm:$0xff]
  %v279 = vld [vmem:[%s158 + $0x184] sm:$0xff]
  %v280 = vld [vmem:[%s158 + $0x18c] sm:$0xff]
  %v281 = vld [vmem:[%s158 + $0x19c] sm:$0xff]
  %v282 = vld [vmem:[%s158 + $0x1a4] sm:$0xff]
  %v283 = vld [vmem:[%s158 + $0x1b4] sm:$0xff]
  %v284 = vld [vmem:[%s158 + $0x1bc] sm:$0xff]
  %v285 = vld [vmem:[%s158 + $0x1cc] sm:$0xff]
  %v286 = vld [vmem:[%s158 + $0x1d4] sm:$0xff]
  %v287 = vld [vmem:[%s158 + $0x1e4] sm:$0xff]
  %v288 = vld [vmem:[%s158 + $0x1ec] sm:$0xff]
  %v289 = vld [vmem:[%s158 + $0x1fc] sm:$0xff]
  %v290 = vld [vmem:[%s158 + $0x204] sm:$0xff]
  %v291 = vld [vmem:[%s158 + $0x214] sm:$0xff]
  %v292 = vld [vmem:[%s158 + $0x21c] sm:$0xff]
  %v293 = vld [vmem:[%s158 + $0x22c] sm:$0xff]
  %v294 = vld [vmem:[%s158 + $0x234] sm:$0xff]
  %v295 = vld [vmem:[%s158 + $0x244] sm:$0xff]
  %v296 = vld [vmem:[%s158 + $0x24c] sm:$0xff]
  %v297 = vld [vmem:[%s158 + $0x25c] sm:$0xff]
  %v298 = vld [vmem:[%s158 + $0x264] sm:$0xff]
  %v299 = vld [vmem:[%s158 + $0x274] sm:$0xff]
  %v300 = vld [vmem:[%s158 + $0x27c] sm:$0xff]
  %v301 = vld [vmem:[%s158 + $0x28c] sm:$0xff]
  %v302 = vld [vmem:[%s158 + $0x294] sm:$0xff]
  %s303 = scalar_lea.vmem %s0, 96
  %v304 = vld [vmem:[%s303] sm:$0xff]
  %v305 = vld [vmem:[%s303 + $0x8] sm:$0xff]
  %v306 = vld [vmem:[%s303 + $0x18] sm:$0xff]
  %v307 = vld [vmem:[%s303 + $0x20] sm:$0xff]
  %v308 = vld [vmem:[%s303 + $0x30] sm:$0xff]
  %v309 = vld [vmem:[%s303 + $0x38] sm:$0xff]
  %v310 = vld [vmem:[%s303 + $0x48] sm:$0xff]
  %v311 = vld [vmem:[%s303 + $0x50] sm:$0xff]
  %v312 = vld [vmem:[%s303 + $0x60] sm:$0xff]
  %v313 = vld [vmem:[%s303 + $0x68] sm:$0xff]
  %v314 = vld [vmem:[%s303 + $0x78] sm:$0xff]
  %v315 = vld [vmem:[%s303 + $0x80] sm:$0xff]
  %v316 = vld [vmem:[%s303 + $0x90] sm:$0xff]
  %v317 = vld [vmem:[%s303 + $0x98] sm:$0xff]
  %v318 = vld [vmem:[%s303 + $0xa8] sm:$0xff]
  %v319 = vld [vmem:[%s303 + $0xb0] sm:$0xff]
  %v320 = vld [vmem:[%s303 + $0xc0] sm:$0xff]
  %v321 = vld [vmem:[%s303 + $0xc8] sm:$0xff]
  %v322 = vld [vmem:[%s303 + $0xd8] sm:$0xff]
  %v323 = vld [vmem:[%s303 + $0xe0] sm:$0xff]
  %v324 = vld [vmem:[%s303 + $0xf0] sm:$0xff]
  %v325 = vld [vmem:[%s303 + $0xf8] sm:$0xff]
  %v326 = vld [vmem:[%s303 + $0x108] sm:$0xff]
  %v327 = vld [vmem:[%s303 + $0x110] sm:$0xff]
  %v328 = vld [vmem:[%s303 + $0x180] sm:$0xff]
  %v329 = vld [vmem:[%s303 + $0x188] sm:$0xff]
  %v330 = vld [vmem:[%s303 + $0x198] sm:$0xff]
  %v331 = vld [vmem:[%s303 + $0x1a0] sm:$0xff]
  %v332 = vld [vmem:[%s303 + $0x1b0] sm:$0xff]
  %v333 = vld [vmem:[%s303 + $0x1b8] sm:$0xff]
  %v334 = vld [vmem:[%s303 + $0x1c8] sm:$0xff]
  %v335 = vld [vmem:[%s303 + $0x1d0] sm:$0xff]
  %v336 = vld [vmem:[%s303 + $0x1e0] sm:$0xff]
  %v337 = vld [vmem:[%s303 + $0x1e8] sm:$0xff]
  %v338 = vld [vmem:[%s303 + $0x1f8] sm:$0xff]
  %v339 = vld [vmem:[%s303 + $0x200] sm:$0xff]
  %v340 = vld [vmem:[%s303 + $0x210] sm:$0xff]
  %v341 = vld [vmem:[%s303 + $0x218] sm:$0xff]
  %v342 = vld [vmem:[%s303 + $0x228] sm:$0xff]
  %v343 = vld [vmem:[%s303 + $0x230] sm:$0xff]
  %v344 = vld [vmem:[%s303 + $0x240] sm:$0xff]
  %v345 = vld [vmem:[%s303 + $0x248] sm:$0xff]
  %v346 = vld [vmem:[%s303 + $0x258] sm:$0xff]
  %v347 = vld [vmem:[%s303 + $0x260] sm:$0xff]
  %v348 = vld [vmem:[%s303 + $0x270] sm:$0xff]
  %v349 = vld [vmem:[%s303 + $0x278] sm:$0xff]
  %v350 = vld [vmem:[%s303 + $0x288] sm:$0xff]
  %v351 = vld [vmem:[%s303 + $0x290] sm:$0xff]
  %v352 = vld [vmem:[%s303 + $0x2] sm:$0xff]
  %v353 = vld [vmem:[%s303 + $0xa] sm:$0xff]
  %v354 = vld [vmem:[%s303 + $0x1a] sm:$0xff]
  %v355 = vld [vmem:[%s303 + $0x22] sm:$0xff]
  %v356 = vld [vmem:[%s303 + $0x32] sm:$0xff]
  %v357 = vld [vmem:[%s303 + $0x3a] sm:$0xff]
  %v358 = vld [vmem:[%s303 + $0x4a] sm:$0xff]
  %v359 = vld [vmem:[%s303 + $0x52] sm:$0xff]
  %v360 = vld [vmem:[%s303 + $0x62] sm:$0xff]
  %v361 = vld [vmem:[%s303 + $0x6a] sm:$0xff]
  %v362 = vld [vmem:[%s303 + $0x7a] sm:$0xff]
  %v363 = vld [vmem:[%s303 + $0x82] sm:$0xff]
  %v364 = vld [vmem:[%s303 + $0x92] sm:$0xff]
  %v365 = vld [vmem:[%s303 + $0x9a] sm:$0xff]
  %v366 = vld [vmem:[%s303 + $0xaa] sm:$0xff]
  %v367 = vld [vmem:[%s303 + $0xb2] sm:$0xff]
  %v368 = vld [vmem:[%s303 + $0xc2] sm:$0xff]
  %v369 = vld [vmem:[%s303 + $0xca] sm:$0xff]
  %v370 = vld [vmem:[%s303 + $0xda] sm:$0xff]
  %v371 = vld [vmem:[%s303 + $0xe2] sm:$0xff]
  %v372 = vld [vmem:[%s303 + $0xf2] sm:$0xff]
  %v373 = vld [vmem:[%s303 + $0xfa] sm:$0xff]
  %v374 = vld [vmem:[%s303 + $0x10a] sm:$0xff]
  %v375 = vld [vmem:[%s303 + $0x112] sm:$0xff]
  %v376 = vld [vmem:[%s303 + $0x182] sm:$0xff]
  %v377 = vld [vmem:[%s303 + $0x18a] sm:$0xff]
  %v378 = vld [vmem:[%s303 + $0x19a] sm:$0xff]
  %v379 = vld [vmem:[%s303 + $0x1a2] sm:$0xff]
  %v380 = vld [vmem:[%s303 + $0x1b2] sm:$0xff]
  %v381 = vld [vmem:[%s303 + $0x1ba] sm:$0xff]
  %v382 = vld [vmem:[%s303 + $0x1ca] sm:$0xff]
  %v383 = vld [vmem:[%s303 + $0x1d2] sm:$0xff]
  %v384 = vld [vmem:[%s303 + $0x1e2] sm:$0xff]
  %v385 = vld [vmem:[%s303 + $0x1ea] sm:$0xff]
  %v386 = vld [vmem:[%s303 + $0x1fa] sm:$0xff]
  %v387 = vld [vmem:[%s303 + $0x202] sm:$0xff]
  %v388 = vld [vmem:[%s303 + $0x212] sm:$0xff]
  %v389 = vld [vmem:[%s303 + $0x21a] sm:$0xff]
  %v390 = vld [vmem:[%s303 + $0x22a] sm:$0xff]
  %v391 = vld [vmem:[%s303 + $0x232] sm:$0xff]
  %v392 = vld [vmem:[%s303 + $0x242] sm:$0xff]
  %v393 = vld [vmem:[%s303 + $0x24a] sm:$0xff]
  %v394 = vld [vmem:[%s303 + $0x25a] sm:$0xff]
  %v395 = vld [vmem:[%s303 + $0x262] sm:$0xff]
  %v396 = vld [vmem:[%s303 + $0x272] sm:$0xff]
  %v397 = vld [vmem:[%s303 + $0x27a] sm:$0xff]
  %v398 = vld [vmem:[%s303 + $0x28a] sm:$0xff]
  %v399 = vld [vmem:[%s303 + $0x292] sm:$0xff]
  %v400 = vld [vmem:[%s303 + $0x4] sm:$0xff]
  %v401 = vld [vmem:[%s303 + $0xc] sm:$0xff]
  %v402 = vld [vmem:[%s303 + $0x1c] sm:$0xff]
  %v403 = vld [vmem:[%s303 + $0x24] sm:$0xff]
  %v404 = vld [vmem:[%s303 + $0x34] sm:$0xff]
  %v405 = vld [vmem:[%s303 + $0x3c] sm:$0xff]
  %v406 = vld [vmem:[%s303 + $0x4c] sm:$0xff]
  %v407 = vld [vmem:[%s303 + $0x54] sm:$0xff]
  %v408 = vld [vmem:[%s303 + $0x64] sm:$0xff]
  %v409 = vld [vmem:[%s303 + $0x6c] sm:$0xff]
  %v410 = vld [vmem:[%s303 + $0x7c] sm:$0xff]
  %v411 = vld [vmem:[%s303 + $0x84] sm:$0xff]
  %v412 = vld [vmem:[%s303 + $0x94] sm:$0xff]
  %v413 = vld [vmem:[%s303 + $0x9c] sm:$0xff]
  %v414 = vld [vmem:[%s303 + $0xac] sm:$0xff]
  %v415 = vld [vmem:[%s303 + $0xb4] sm:$0xff]
  %v416 = vld [vmem:[%s303 + $0xc4] sm:$0xff]
  %v417 = vld [vmem:[%s303 + $0xcc] sm:$0xff]
  %v418 = vld [vmem:[%s303 + $0xdc] sm:$0xff]
  %v419 = vld [vmem:[%s303 + $0xe4] sm:$0xff]
  %v420 = vld [vmem:[%s303 + $0xf4] sm:$0xff]
  %v421 = vld [vmem:[%s303 + $0xfc] sm:$0xff]
  %v422 = vld [vmem:[%s303 + $0x10c] sm:$0xff]
  %v423 = vld [vmem:[%s303 + $0x114] sm:$0xff]
  %v424 = vld [vmem:[%s303 + $0x184] sm:$0xff]
  %v425 = vld [vmem:[%s303 + $0x18c] sm:$0xff]
  %v426 = vld [vmem:[%s303 + $0x19c] sm:$0xff]
  %v427 = vld [vmem:[%s303 + $0x1a4] sm:$0xff]
  %v428 = vld [vmem:[%s303 + $0x1b4] sm:$0xff]
  %v429 = vld [vmem:[%s303 + $0x1bc] sm:$0xff]
  %v430 = vld [vmem:[%s303 + $0x1cc] sm:$0xff]
  %v431 = vld [vmem:[%s303 + $0x1d4] sm:$0xff]
  %v432 = vld [vmem:[%s303 + $0x1e4] sm:$0xff]
  %v433 = vld [vmem:[%s303 + $0x1ec] sm:$0xff]
  %v434 = vld [vmem:[%s303 + $0x1fc] sm:$0xff]
  %v435 = vld [vmem:[%s303 + $0x204] sm:$0xff]
  %v436 = vld [vmem:[%s303 + $0x214] sm:$0xff]
  %v437 = vld [vmem:[%s303 + $0x21c] sm:$0xff]
  %v438 = vld [vmem:[%s303 + $0x22c] sm:$0xff]
  %v439 = vld [vmem:[%s303 + $0x234] sm:$0xff]
  %v440 = vld [vmem:[%s303 + $0x244] sm:$0xff]
  %v441 = vld [vmem:[%s303 + $0x24c] sm:$0xff]
  %v442 = vld [vmem:[%s303 + $0x25c] sm:$0xff]
  %v443 = vld [vmem:[%s303 + $0x264] sm:$0xff]
  %v444 = vld [vmem:[%s303 + $0x274] sm:$0xff]
  %v445 = vld [vmem:[%s303 + $0x27c] sm:$0xff]
  %v446 = vld [vmem:[%s303 + $0x28c] sm:$0xff]
  %v447 = vld [vmem:[%s303 + $0x294] sm:$0xff]
  %496 = vrot.lane.b32.xlu0 %v62, 10
  %v497 = vpop.permute.xlu0 %496
  %498 = vrot.lane.b32.xlu0 %v63, 10
  %v499 = vpop.permute.xlu0 %498
  %500 = vrot.lane.b32.xlu0 %v64, 10
  %v501 = vpop.permute.xlu0 %500
  %502 = vrot.lane.b32.xlu0 %v65, 10
  %v503 = vpop.permute.xlu0 %502
  %504 = vrot.lane.b32.xlu0 %v66, 10
  %v505 = vpop.permute.xlu0 %504
  %506 = vrot.lane.b32.xlu0 %v67, 10
  %v507 = vpop.permute.xlu0 %506
  %508 = vrot.lane.b32.xlu0 %v68, 10
  %v509 = vpop.permute.xlu0 %508
  %510 = vrot.lane.b32.xlu0 %v69, 10
  %v511 = vpop.permute.xlu0 %510
  %512 = vrot.lane.b32.xlu0 %v70, 10
  %v513 = vpop.permute.xlu0 %512
  %514 = vrot.lane.b32.xlu0 %v71, 10
  %v515 = vpop.permute.xlu0 %514
  %516 = vrot.lane.b32.xlu0 %v72, 10
  %v517 = vpop.permute.xlu0 %516
  %518 = vrot.lane.b32.xlu0 %v73, 10
  %v519 = vpop.permute.xlu0 %518
  %520 = vrot.lane.b32.xlu0 %v74, 10
  %v521 = vpop.permute.xlu0 %520
  %522 = vrot.lane.b32.xlu0 %v75, 10
  %v523 = vpop.permute.xlu0 %522
  %524 = vrot.lane.b32.xlu0 %v76, 10
  %v525 = vpop.permute.xlu0 %524
  %526 = vrot.lane.b32.xlu0 %v77, 10
  %v527 = vpop.permute.xlu0 %526
  %528 = vrot.lane.b32.xlu0 %v78, 10
  %v529 = vpop.permute.xlu0 %528
  %530 = vrot.lane.b32.xlu0 %v79, 10
  %v531 = vpop.permute.xlu0 %530
  %532 = vrot.lane.b32.xlu0 %v80, 10
  %v533 = vpop.permute.xlu0 %532
  %534 = vrot.lane.b32.xlu0 %v81, 10
  %v535 = vpop.permute.xlu0 %534
  %536 = vrot.lane.b32.xlu0 %v82, 10
  %v537 = vpop.permute.xlu0 %536
  %538 = vrot.lane.b32.xlu0 %v83, 10
  %v539 = vpop.permute.xlu0 %538
  %540 = vrot.lane.b32.xlu0 %v84, 10
  %v541 = vpop.permute.xlu0 %540
  %542 = vrot.lane.b32.xlu0 %v85, 10
  %v543 = vpop.permute.xlu0 %542
  %544 = vrot.lane.b32.xlu0 %v86, 10
  %v545 = vpop.permute.xlu0 %544
  %546 = vrot.lane.b32.xlu0 %v87, 10
  %v547 = vpop.permute.xlu0 %546
  %548 = vrot.lane.b32.xlu0 %v88, 10
  %v549 = vpop.permute.xlu0 %548
  %550 = vrot.lane.b32.xlu0 %v89, 10
  %v551 = vpop.permute.xlu0 %550
  %552 = vrot.lane.b32.xlu0 %v90, 10
  %v553 = vpop.permute.xlu0 %552
  %554 = vrot.lane.b32.xlu0 %v91, 10
  %v555 = vpop.permute.xlu0 %554
  %556 = vrot.lane.b32.xlu0 %v92, 10
  %v557 = vpop.permute.xlu0 %556
  %558 = vrot.lane.b32.xlu0 %v93, 10
  %v559 = vpop.permute.xlu0 %558
  %560 = vrot.lane.b32.xlu0 %v94, 10
  %v561 = vpop.permute.xlu0 %560
  %562 = vrot.lane.b32.xlu0 %v95, 10
  %v563 = vpop.permute.xlu0 %562
  %564 = vrot.lane.b32.xlu0 %v96, 10
  %v565 = vpop.permute.xlu0 %564
  %566 = vrot.lane.b32.xlu0 %v97, 10
  %v567 = vpop.permute.xlu0 %566
  %568 = vrot.lane.b32.xlu0 %v98, 10
  %v569 = vpop.permute.xlu0 %568
  %570 = vrot.lane.b32.xlu0 %v99, 10
  %v571 = vpop.permute.xlu0 %570
  %572 = vrot.lane.b32.xlu0 %v100, 10
  %v573 = vpop.permute.xlu0 %572
  %574 = vrot.lane.b32.xlu0 %v101, 10
  %v575 = vpop.permute.xlu0 %574
  %576 = vrot.lane.b32.xlu0 %v102, 10
  %v577 = vpop.permute.xlu0 %576
  %578 = vrot.lane.b32.xlu0 %v103, 10
  %v579 = vpop.permute.xlu0 %578
  %580 = vrot.lane.b32.xlu0 %v104, 10
  %v581 = vpop.permute.xlu0 %580
  %582 = vrot.lane.b32.xlu0 %v105, 10
  %v583 = vpop.permute.xlu0 %582
  %584 = vrot.lane.b32.xlu0 %v106, 10
  %v585 = vpop.permute.xlu0 %584
  %586 = vrot.lane.b32.xlu0 %v107, 10
  %v587 = vpop.permute.xlu0 %586
  %588 = vrot.lane.b32.xlu0 %v108, 10
  %v589 = vpop.permute.xlu0 %588
  %590 = vrot.lane.b32.xlu0 %v109, 10
  %v591 = vpop.permute.xlu0 %590
  %688 = vrot.lane.b32.xlu0 %v110, 20
  %v689 = vpop.permute.xlu0 %688
  %690 = vrot.lane.b32.xlu0 %v111, 20
  %v691 = vpop.permute.xlu0 %690
  %692 = vrot.lane.b32.xlu0 %v112, 20
  %v693 = vpop.permute.xlu0 %692
  %694 = vrot.lane.b32.xlu0 %v113, 20
  %v695 = vpop.permute.xlu0 %694
  %696 = vrot.lane.b32.xlu0 %v114, 20
  %v697 = vpop.permute.xlu0 %696
  %698 = vrot.lane.b32.xlu0 %v115, 20
  %v699 = vpop.permute.xlu0 %698
  %700 = vrot.lane.b32.xlu0 %v116, 20
  %v701 = vpop.permute.xlu0 %700
  %702 = vrot.lane.b32.xlu0 %v117, 20
  %v703 = vpop.permute.xlu0 %702
  %704 = vrot.lane.b32.xlu0 %v118, 20
  %v705 = vpop.permute.xlu0 %704
  %706 = vrot.lane.b32.xlu0 %v119, 20
  %v707 = vpop.permute.xlu0 %706
  %708 = vrot.lane.b32.xlu0 %v120, 20
  %v709 = vpop.permute.xlu0 %708
  %710 = vrot.lane.b32.xlu0 %v121, 20
  %v711 = vpop.permute.xlu0 %710
  %712 = vrot.lane.b32.xlu0 %v122, 20
  %v713 = vpop.permute.xlu0 %712
  %714 = vrot.lane.b32.xlu0 %v123, 20
  %v715 = vpop.permute.xlu0 %714
  %716 = vrot.lane.b32.xlu0 %v124, 20
  %v717 = vpop.permute.xlu0 %716
  %718 = vrot.lane.b32.xlu0 %v125, 20
  %v719 = vpop.permute.xlu0 %718
  %720 = vrot.lane.b32.xlu0 %v126, 20
  %v721 = vpop.permute.xlu0 %720
  %722 = vrot.lane.b32.xlu0 %v127, 20
  %v723 = vpop.permute.xlu0 %722
  %724 = vrot.lane.b32.xlu0 %v128, 20
  %v725 = vpop.permute.xlu0 %724
  %726 = vrot.lane.b32.xlu0 %v129, 20
  %v727 = vpop.permute.xlu0 %726
  %728 = vrot.lane.b32.xlu0 %v130, 20
  %v729 = vpop.permute.xlu0 %728
  %730 = vrot.lane.b32.xlu0 %v131, 20
  %v731 = vpop.permute.xlu0 %730
  %732 = vrot.lane.b32.xlu0 %v132, 20
  %v733 = vpop.permute.xlu0 %732
  %734 = vrot.lane.b32.xlu0 %v133, 20
  %v735 = vpop.permute.xlu0 %734
  %736 = vrot.lane.b32.xlu0 %v134, 20
  %v737 = vpop.permute.xlu0 %736
  %738 = vrot.lane.b32.xlu0 %v135, 20
  %v739 = vpop.permute.xlu0 %738
  %740 = vrot.lane.b32.xlu0 %v136, 20
  %v741 = vpop.permute.xlu0 %740
  %742 = vrot.lane.b32.xlu0 %v137, 20
  %v743 = vpop.permute.xlu0 %742
  %744 = vrot.lane.b32.xlu0 %v138, 20
  %v745 = vpop.permute.xlu0 %744
  %746 = vrot.lane.b32.xlu0 %v139, 20
  %v747 = vpop.permute.xlu0 %746
  %748 = vrot.lane.b32.xlu0 %v140, 20
  %v749 = vpop.permute.xlu0 %748
  %750 = vrot.lane.b32.xlu0 %v141, 20
  %v751 = vpop.permute.xlu0 %750
  %752 = vrot.lane.b32.xlu0 %v142, 20
  %v753 = vpop.permute.xlu0 %752
  %754 = vrot.lane.b32.xlu0 %v143, 20
  %v755 = vpop.permute.xlu0 %754
  %756 = vrot.lane.b32.xlu0 %v144, 20
  %v757 = vpop.permute.xlu0 %756
  %758 = vrot.lane.b32.xlu0 %v145, 20
  %v759 = vpop.permute.xlu0 %758
  %760 = vrot.lane.b32.xlu0 %v146, 20
  %v761 = vpop.permute.xlu0 %760
  %762 = vrot.lane.b32.xlu0 %v147, 20
  %v763 = vpop.permute.xlu0 %762
  %764 = vrot.lane.b32.xlu0 %v148, 20
  %v765 = vpop.permute.xlu0 %764
  %766 = vrot.lane.b32.xlu0 %v149, 20
  %v767 = vpop.permute.xlu0 %766
  %768 = vrot.lane.b32.xlu0 %v150, 20
  %v769 = vpop.permute.xlu0 %768
  %770 = vrot.lane.b32.xlu0 %v151, 20
  %v771 = vpop.permute.xlu0 %770
  %772 = vrot.lane.b32.xlu0 %v152, 20
  %v773 = vpop.permute.xlu0 %772
  %774 = vrot.lane.b32.xlu0 %v153, 20
  %v775 = vpop.permute.xlu0 %774
  %776 = vrot.lane.b32.xlu0 %v154, 20
  %v777 = vpop.permute.xlu0 %776
  %778 = vrot.lane.b32.xlu0 %v155, 20
  %v779 = vpop.permute.xlu0 %778
  %780 = vrot.lane.b32.xlu0 %v156, 20
  %v781 = vpop.permute.xlu0 %780
  %782 = vrot.lane.b32.xlu0 %v157, 20
  %v783 = vpop.permute.xlu0 %782
  %880 = vrot.lane.b32.xlu0 %v159, 30
  %v881 = vpop.permute.xlu0 %880
  %882 = vrot.lane.b32.xlu0 %v160, 30
  %v883 = vpop.permute.xlu0 %882
  %884 = vrot.lane.b32.xlu0 %v161, 30
  %v885 = vpop.permute.xlu0 %884
  %886 = vrot.lane.b32.xlu0 %v162, 30
  %v887 = vpop.permute.xlu0 %886
  %888 = vrot.lane.b32.xlu0 %v163, 30
  %v889 = vpop.permute.xlu0 %888
  %890 = vrot.lane.b32.xlu0 %v164, 30
  %v891 = vpop.permute.xlu0 %890
  %892 = vrot.lane.b32.xlu0 %v165, 30
  %v893 = vpop.permute.xlu0 %892
  %894 = vrot.lane.b32.xlu0 %v166, 30
  %v895 = vpop.permute.xlu0 %894
  %896 = vrot.lane.b32.xlu0 %v167, 30
  %v897 = vpop.permute.xlu0 %896
  %898 = vrot.lane.b32.xlu0 %v168, 30
  %v899 = vpop.permute.xlu0 %898
  %900 = vrot.lane.b32.xlu0 %v169, 30
  %v901 = vpop.permute.xlu0 %900
  %902 = vrot.lane.b32.xlu0 %v170, 30
  %v903 = vpop.permute.xlu0 %902
  %904 = vrot.lane.b32.xlu0 %v171, 30
  %v905 = vpop.permute.xlu0 %904
  %906 = vrot.lane.b32.xlu0 %v172, 30
  %v907 = vpop.permute.xlu0 %906
  %908 = vrot.lane.b32.xlu0 %v173, 30
  %v909 = vpop.permute.xlu0 %908
  %910 = vrot.lane.b32.xlu0 %v174, 30
  %v911 = vpop.permute.xlu0 %910
  %912 = vrot.lane.b32.xlu0 %v175, 30
  %v913 = vpop.permute.xlu0 %912
  %914 = vrot.lane.b32.xlu0 %v176, 30
  %v915 = vpop.permute.xlu0 %914
  %916 = vrot.lane.b32.xlu0 %v177, 30
  %v917 = vpop.permute.xlu0 %916
  %918 = vrot.lane.b32.xlu0 %v178, 30
  %v919 = vpop.permute.xlu0 %918
  %920 = vrot.lane.b32.xlu0 %v179, 30
  %v921 = vpop.permute.xlu0 %920
  %922 = vrot.lane.b32.xlu0 %v180, 30
  %v923 = vpop.permute.xlu0 %922
  %924 = vrot.lane.b32.xlu0 %v181, 30
  %v925 = vpop.permute.xlu0 %924
  %926 = vrot.lane.b32.xlu0 %v182, 30
  %v927 = vpop.permute.xlu0 %926
  %928 = vrot.lane.b32.xlu0 %v183, 30
  %v929 = vpop.permute.xlu0 %928
  %930 = vrot.lane.b32.xlu0 %v184, 30
  %v931 = vpop.permute.xlu0 %930
  %932 = vrot.lane.b32.xlu0 %v185, 30
  %v933 = vpop.permute.xlu0 %932
  %934 = vrot.lane.b32.xlu0 %v186, 30
  %v935 = vpop.permute.xlu0 %934
  %936 = vrot.lane.b32.xlu0 %v187, 30
  %v937 = vpop.permute.xlu0 %936
  %938 = vrot.lane.b32.xlu0 %v188, 30
  %v939 = vpop.permute.xlu0 %938
  %940 = vrot.lane.b32.xlu0 %v189, 30
  %v941 = vpop.permute.xlu0 %940
  %942 = vrot.lane.b32.xlu0 %v190, 30
  %v943 = vpop.permute.xlu0 %942
  %944 = vrot.lane.b32.xlu0 %v191, 30
  %v945 = vpop.permute.xlu0 %944
  %946 = vrot.lane.b32.xlu0 %v192, 30
  %v947 = vpop.permute.xlu0 %946
  %948 = vrot.lane.b32.xlu0 %v193, 30
  %v949 = vpop.permute.xlu0 %948
  %950 = vrot.lane.b32.xlu0 %v194, 30
  %v951 = vpop.permute.xlu0 %950
  %952 = vrot.lane.b32.xlu0 %v195, 30
  %v953 = vpop.permute.xlu0 %952
  %954 = vrot.lane.b32.xlu0 %v196, 30
  %v955 = vpop.permute.xlu0 %954
  %956 = vrot.lane.b32.xlu0 %v197, 30
  %v957 = vpop.permute.xlu0 %956
  %958 = vrot.lane.b32.xlu0 %v198, 30
  %v959 = vpop.permute.xlu0 %958
  %960 = vrot.lane.b32.xlu0 %v199, 30
  %v961 = vpop.permute.xlu0 %960
  %962 = vrot.lane.b32.xlu0 %v200, 30
  %v963 = vpop.permute.xlu0 %962
  %964 = vrot.lane.b32.xlu0 %v201, 30
  %v965 = vpop.permute.xlu0 %964
  %966 = vrot.lane.b32.xlu0 %v202, 30
  %v967 = vpop.permute.xlu0 %966
  %968 = vrot.lane.b32.xlu0 %v203, 30
  %v969 = vpop.permute.xlu0 %968
  %970 = vrot.lane.b32.xlu0 %v204, 30
  %v971 = vpop.permute.xlu0 %970
  %972 = vrot.lane.b32.xlu0 %v205, 30
  %v973 = vpop.permute.xlu0 %972
  %974 = vrot.lane.b32.xlu0 %v206, 30
  %v975 = vpop.permute.xlu0 %974
  %1072 = vrot.lane.b32.xlu0 %v207, 40
  %v1073 = vpop.permute.xlu0 %1072
  %1074 = vrot.lane.b32.xlu0 %v208, 40
  %v1075 = vpop.permute.xlu0 %1074
  %1076 = vrot.lane.b32.xlu0 %v209, 40
  %v1077 = vpop.permute.xlu0 %1076
  %1078 = vrot.lane.b32.xlu0 %v210, 40
  %v1079 = vpop.permute.xlu0 %1078
  %1080 = vrot.lane.b32.xlu0 %v211, 40
  %v1081 = vpop.permute.xlu0 %1080
  %1082 = vrot.lane.b32.xlu0 %v212, 40
  %v1083 = vpop.permute.xlu0 %1082
  %1084 = vrot.lane.b32.xlu0 %v213, 40
  %v1085 = vpop.permute.xlu0 %1084
  %1086 = vrot.lane.b32.xlu0 %v214, 40
  %v1087 = vpop.permute.xlu0 %1086
  %1088 = vrot.lane.b32.xlu0 %v215, 40
  %v1089 = vpop.permute.xlu0 %1088
  %1090 = vrot.lane.b32.xlu0 %v216, 40
  %v1091 = vpop.permute.xlu0 %1090
  %1092 = vrot.lane.b32.xlu0 %v217, 40
  %v1093 = vpop.permute.xlu0 %1092
  %1094 = vrot.lane.b32.xlu0 %v218, 40
  %v1095 = vpop.permute.xlu0 %1094
  %1096 = vrot.lane.b32.xlu0 %v219, 40
  %v1097 = vpop.permute.xlu0 %1096
  %1098 = vrot.lane.b32.xlu0 %v220, 40
  %v1099 = vpop.permute.xlu0 %1098
  %1100 = vrot.lane.b32.xlu0 %v221, 40
  %v1101 = vpop.permute.xlu0 %1100
  %1102 = vrot.lane.b32.xlu0 %v222, 40
  %v1103 = vpop.permute.xlu0 %1102
  %1104 = vrot.lane.b32.xlu0 %v223, 40
  %v1105 = vpop.permute.xlu0 %1104
  %1106 = vrot.lane.b32.xlu0 %v224, 40
  %v1107 = vpop.permute.xlu0 %1106
  %1108 = vrot.lane.b32.xlu0 %v225, 40
  %v1109 = vpop.permute.xlu0 %1108
  %1110 = vrot.lane.b32.xlu0 %v226, 40
  %v1111 = vpop.permute.xlu0 %1110
  %1112 = vrot.lane.b32.xlu0 %v227, 40
  %v1113 = vpop.permute.xlu0 %1112
  %1114 = vrot.lane.b32.xlu0 %v228, 40
  %v1115 = vpop.permute.xlu0 %1114
  %1116 = vrot.lane.b32.xlu0 %v229, 40
  %v1117 = vpop.permute.xlu0 %1116
  %1118 = vrot.lane.b32.xlu0 %v230, 40
  %v1119 = vpop.permute.xlu0 %1118
  %1120 = vrot.lane.b32.xlu0 %v231, 40
  %v1121 = vpop.permute.xlu0 %1120
  %1122 = vrot.lane.b32.xlu0 %v232, 40
  %v1123 = vpop.permute.xlu0 %1122
  %1124 = vrot.lane.b32.xlu0 %v233, 40
  %v1125 = vpop.permute.xlu0 %1124
  %1126 = vrot.lane.b32.xlu0 %v234, 40
  %v1127 = vpop.permute.xlu0 %1126
  %1128 = vrot.lane.b32.xlu0 %v235, 40
  %v1129 = vpop.permute.xlu0 %1128
  %1130 = vrot.lane.b32.xlu0 %v236, 40
  %v1131 = vpop.permute.xlu0 %1130
  %1132 = vrot.lane.b32.xlu0 %v237, 40
  %v1133 = vpop.permute.xlu0 %1132
  %1134 = vrot.lane.b32.xlu0 %v238, 40
  %v1135 = vpop.permute.xlu0 %1134
  %1136 = vrot.lane.b32.xlu0 %v239, 40
  %v1137 = vpop.permute.xlu0 %1136
  %1138 = vrot.lane.b32.xlu0 %v240, 40
  %v1139 = vpop.permute.xlu0 %1138
  %1140 = vrot.lane.b32.xlu0 %v241, 40
  %v1141 = vpop.permute.xlu0 %1140
  %1142 = vrot.lane.b32.xlu0 %v242, 40
  %v1143 = vpop.permute.xlu0 %1142
  %1144 = vrot.lane.b32.xlu0 %v243, 40
  %v1145 = vpop.permute.xlu0 %1144
  %1146 = vrot.lane.b32.xlu0 %v244, 40
  %v1147 = vpop.permute.xlu0 %1146
  %1148 = vrot.lane.b32.xlu0 %v245, 40
  %v1149 = vpop.permute.xlu0 %1148
  %1150 = vrot.lane.b32.xlu0 %v246, 40
  %v1151 = vpop.permute.xlu0 %1150
  %1152 = vrot.lane.b32.xlu0 %v247, 40
  %v1153 = vpop.permute.xlu0 %1152
  %1154 = vrot.lane.b32.xlu0 %v248, 40
  %v1155 = vpop.permute.xlu0 %1154
  %1156 = vrot.lane.b32.xlu0 %v249, 40
  %v1157 = vpop.permute.xlu0 %1156
  %1158 = vrot.lane.b32.xlu0 %v250, 40
  %v1159 = vpop.permute.xlu0 %1158
  %1160 = vrot.lane.b32.xlu0 %v251, 40
  %v1161 = vpop.permute.xlu0 %1160
  %1162 = vrot.lane.b32.xlu0 %v252, 40
  %v1163 = vpop.permute.xlu0 %1162
  %1164 = vrot.lane.b32.xlu0 %v253, 40
  %v1165 = vpop.permute.xlu0 %1164
  %1166 = vrot.lane.b32.xlu0 %v254, 40
  %v1167 = vpop.permute.xlu0 %1166
  %1264 = vrot.lane.b32.xlu0 %v255, 50
  %v1265 = vpop.permute.xlu0 %1264
  %1266 = vrot.lane.b32.xlu0 %v256, 50
  %v1267 = vpop.permute.xlu0 %1266
  %1268 = vrot.lane.b32.xlu0 %v257, 50
  %v1269 = vpop.permute.xlu0 %1268
  %1270 = vrot.lane.b32.xlu0 %v258, 50
  %v1271 = vpop.permute.xlu0 %1270
  %1272 = vrot.lane.b32.xlu0 %v259, 50
  %v1273 = vpop.permute.xlu0 %1272
  %1274 = vrot.lane.b32.xlu0 %v260, 50
  %v1275 = vpop.permute.xlu0 %1274
  %1276 = vrot.lane.b32.xlu0 %v261, 50
  %v1277 = vpop.permute.xlu0 %1276
  %1278 = vrot.lane.b32.xlu0 %v262, 50
  %v1279 = vpop.permute.xlu0 %1278
  %1280 = vrot.lane.b32.xlu0 %v263, 50
  %v1281 = vpop.permute.xlu0 %1280
  %1282 = vrot.lane.b32.xlu0 %v264, 50
  %v1283 = vpop.permute.xlu0 %1282
  %1284 = vrot.lane.b32.xlu0 %v265, 50
  %v1285 = vpop.permute.xlu0 %1284
  %1286 = vrot.lane.b32.xlu0 %v266, 50
  %v1287 = vpop.permute.xlu0 %1286
  %1288 = vrot.lane.b32.xlu0 %v267, 50
  %v1289 = vpop.permute.xlu0 %1288
  %1290 = vrot.lane.b32.xlu0 %v268, 50
  %v1291 = vpop.permute.xlu0 %1290
  %1292 = vrot.lane.b32.xlu0 %v269, 50
  %v1293 = vpop.permute.xlu0 %1292
  %1294 = vrot.lane.b32.xlu0 %v270, 50
  %v1295 = vpop.permute.xlu0 %1294
  %1296 = vrot.lane.b32.xlu0 %v271, 50
  %v1297 = vpop.permute.xlu0 %1296
  %1298 = vrot.lane.b32.xlu0 %v272, 50
  %v1299 = vpop.permute.xlu0 %1298
  %1300 = vrot.lane.b32.xlu0 %v273, 50
  %v1301 = vpop.permute.xlu0 %1300
  %1302 = vrot.lane.b32.xlu0 %v274, 50
  %v1303 = vpop.permute.xlu0 %1302
  %1304 = vrot.lane.b32.xlu0 %v275, 50
  %v1305 = vpop.permute.xlu0 %1304
  %1306 = vrot.lane.b32.xlu0 %v276, 50
  %v1307 = vpop.permute.xlu0 %1306
  %1308 = vrot.lane.b32.xlu0 %v277, 50
  %v1309 = vpop.permute.xlu0 %1308
  %1310 = vrot.lane.b32.xlu0 %v278, 50
  %v1311 = vpop.permute.xlu0 %1310
  %1312 = vrot.lane.b32.xlu0 %v279, 50
  %v1313 = vpop.permute.xlu0 %1312
  %1314 = vrot.lane.b32.xlu0 %v280, 50
  %v1315 = vpop.permute.xlu0 %1314
  %1316 = vrot.lane.b32.xlu0 %v281, 50
  %v1317 = vpop.permute.xlu0 %1316
  %1318 = vrot.lane.b32.xlu0 %v282, 50
  %v1319 = vpop.permute.xlu0 %1318
  %1320 = vrot.lane.b32.xlu0 %v283, 50
  %v1321 = vpop.permute.xlu0 %1320
  %1322 = vrot.lane.b32.xlu0 %v284, 50
  %v1323 = vpop.permute.xlu0 %1322
  %1324 = vrot.lane.b32.xlu0 %v285, 50
  %v1325 = vpop.permute.xlu0 %1324
  %1326 = vrot.lane.b32.xlu0 %v286, 50
  %v1327 = vpop.permute.xlu0 %1326
  %1328 = vrot.lane.b32.xlu0 %v287, 50
  %v1329 = vpop.permute.xlu0 %1328
  %1330 = vrot.lane.b32.xlu0 %v288, 50
  %v1331 = vpop.permute.xlu0 %1330
  %1332 = vrot.lane.b32.xlu0 %v289, 50
  %v1333 = vpop.permute.xlu0 %1332
  %1334 = vrot.lane.b32.xlu0 %v290, 50
  %v1335 = vpop.permute.xlu0 %1334
  %1336 = vrot.lane.b32.xlu0 %v291, 50
  %v1337 = vpop.permute.xlu0 %1336
  %1338 = vrot.lane.b32.xlu0 %v292, 50
  %v1339 = vpop.permute.xlu0 %1338
  %1340 = vrot.lane.b32.xlu0 %v293, 50
  %v1341 = vpop.permute.xlu0 %1340
  %1342 = vrot.lane.b32.xlu0 %v294, 50
  %v1343 = vpop.permute.xlu0 %1342
  %1344 = vrot.lane.b32.xlu0 %v295, 50
  %v1345 = vpop.permute.xlu0 %1344
  %1346 = vrot.lane.b32.xlu0 %v296, 50
  %v1347 = vpop.permute.xlu0 %1346
  %1348 = vrot.lane.b32.xlu0 %v297, 50
  %v1349 = vpop.permute.xlu0 %1348
  %1350 = vrot.lane.b32.xlu0 %v298, 50
  %v1351 = vpop.permute.xlu0 %1350
  %1352 = vrot.lane.b32.xlu0 %v299, 50
  %v1353 = vpop.permute.xlu0 %1352
  %1354 = vrot.lane.b32.xlu0 %v300, 50
  %v1355 = vpop.permute.xlu0 %1354
  %1356 = vrot.lane.b32.xlu0 %v301, 50
  %v1357 = vpop.permute.xlu0 %1356
  %1358 = vrot.lane.b32.xlu0 %v302, 50
  %v1359 = vpop.permute.xlu0 %1358
  %1456 = vrot.lane.b32.xlu0 %v304, 60
  %v1457 = vpop.permute.xlu0 %1456
  %1458 = vrot.lane.b32.xlu0 %v305, 60
  %v1459 = vpop.permute.xlu0 %1458
  %1460 = vrot.lane.b32.xlu0 %v306, 60
  %v1461 = vpop.permute.xlu0 %1460
  %1462 = vrot.lane.b32.xlu0 %v307, 60
  %v1463 = vpop.permute.xlu0 %1462
  %1464 = vrot.lane.b32.xlu0 %v308, 60
  %v1465 = vpop.permute.xlu0 %1464
  %1466 = vrot.lane.b32.xlu0 %v309, 60
  %v1467 = vpop.permute.xlu0 %1466
  %1468 = vrot.lane.b32.xlu0 %v310, 60
  %v1469 = vpop.permute.xlu0 %1468
  %1470 = vrot.lane.b32.xlu0 %v311, 60
  %v1471 = vpop.permute.xlu0 %1470
  %1472 = vrot.lane.b32.xlu0 %v312, 60
  %v1473 = vpop.permute.xlu0 %1472
  %1474 = vrot.lane.b32.xlu0 %v313, 60
  %v1475 = vpop.permute.xlu0 %1474
  %1476 = vrot.lane.b32.xlu0 %v314, 60
  %v1477 = vpop.permute.xlu0 %1476
  %1478 = vrot.lane.b32.xlu0 %v315, 60
  %v1479 = vpop.permute.xlu0 %1478
  %1480 = vrot.lane.b32.xlu0 %v316, 60
  %v1481 = vpop.permute.xlu0 %1480
  %1482 = vrot.lane.b32.xlu0 %v317, 60
  %v1483 = vpop.permute.xlu0 %1482
  %1484 = vrot.lane.b32.xlu0 %v318, 60
  %v1485 = vpop.permute.xlu0 %1484
  %1486 = vrot.lane.b32.xlu0 %v319, 60
  %v1487 = vpop.permute.xlu0 %1486
  %1488 = vrot.lane.b32.xlu0 %v320, 60
  %v1489 = vpop.permute.xlu0 %1488
  %1490 = vrot.lane.b32.xlu0 %v321, 60
  %v1491 = vpop.permute.xlu0 %1490
  %1492 = vrot.lane.b32.xlu0 %v322, 60
  %v1493 = vpop.permute.xlu0 %1492
  %1494 = vrot.lane.b32.xlu0 %v323, 60
  %v1495 = vpop.permute.xlu0 %1494
  %1496 = vrot.lane.b32.xlu0 %v324, 60
  %v1497 = vpop.permute.xlu0 %1496
  %1498 = vrot.lane.b32.xlu0 %v325, 60
  %v1499 = vpop.permute.xlu0 %1498
  %1500 = vrot.lane.b32.xlu0 %v326, 60
  %v1501 = vpop.permute.xlu0 %1500
  %1502 = vrot.lane.b32.xlu0 %v327, 60
  %v1503 = vpop.permute.xlu0 %1502
  %1504 = vrot.lane.b32.xlu0 %v328, 60
  %v1505 = vpop.permute.xlu0 %1504
  %1506 = vrot.lane.b32.xlu0 %v329, 60
  %v1507 = vpop.permute.xlu0 %1506
  %1508 = vrot.lane.b32.xlu0 %v330, 60
  %v1509 = vpop.permute.xlu0 %1508
  %1510 = vrot.lane.b32.xlu0 %v331, 60
  %v1511 = vpop.permute.xlu0 %1510
  %1512 = vrot.lane.b32.xlu0 %v332, 60
  %v1513 = vpop.permute.xlu0 %1512
  %1514 = vrot.lane.b32.xlu0 %v333, 60
  %v1515 = vpop.permute.xlu0 %1514
  %1516 = vrot.lane.b32.xlu0 %v334, 60
  %v1517 = vpop.permute.xlu0 %1516
  %1518 = vrot.lane.b32.xlu0 %v335, 60
  %v1519 = vpop.permute.xlu0 %1518
  %1520 = vrot.lane.b32.xlu0 %v336, 60
  %v1521 = vpop.permute.xlu0 %1520
  %1522 = vrot.lane.b32.xlu0 %v337, 60
  %v1523 = vpop.permute.xlu0 %1522
  %1524 = vrot.lane.b32.xlu0 %v338, 60
  %v1525 = vpop.permute.xlu0 %1524
  %1526 = vrot.lane.b32.xlu0 %v339, 60
  %v1527 = vpop.permute.xlu0 %1526
  %1528 = vrot.lane.b32.xlu0 %v340, 60
  %v1529 = vpop.permute.xlu0 %1528
  %1530 = vrot.lane.b32.xlu0 %v341, 60
  %v1531 = vpop.permute.xlu0 %1530
  %1532 = vrot.lane.b32.xlu0 %v342, 60
  %v1533 = vpop.permute.xlu0 %1532
  %1534 = vrot.lane.b32.xlu0 %v343, 60
  %v1535 = vpop.permute.xlu0 %1534
  %1536 = vrot.lane.b32.xlu0 %v344, 60
  %v1537 = vpop.permute.xlu0 %1536
  %1538 = vrot.lane.b32.xlu0 %v345, 60
  %v1539 = vpop.permute.xlu0 %1538
  %1540 = vrot.lane.b32.xlu0 %v346, 60
  %v1541 = vpop.permute.xlu0 %1540
  %1542 = vrot.lane.b32.xlu0 %v347, 60
  %v1543 = vpop.permute.xlu0 %1542
  %1544 = vrot.lane.b32.xlu0 %v348, 60
  %v1545 = vpop.permute.xlu0 %1544
  %1546 = vrot.lane.b32.xlu0 %v349, 60
  %v1547 = vpop.permute.xlu0 %1546
  %1548 = vrot.lane.b32.xlu0 %v350, 60
  %v1549 = vpop.permute.xlu0 %1548
  %1550 = vrot.lane.b32.xlu0 %v351, 60
  %v1551 = vpop.permute.xlu0 %1550
  %1648 = vrot.lane.b32.xlu0 %v352, 70
  %v1649 = vpop.permute.xlu0 %1648
  %1650 = vrot.lane.b32.xlu0 %v353, 70
  %v1651 = vpop.permute.xlu0 %1650
  %1652 = vrot.lane.b32.xlu0 %v354, 70
  %v1653 = vpop.permute.xlu0 %1652
  %1654 = vrot.lane.b32.xlu0 %v355, 70
  %v1655 = vpop.permute.xlu0 %1654
  %1656 = vrot.lane.b32.xlu0 %v356, 70
  %v1657 = vpop.permute.xlu0 %1656
  %1658 = vrot.lane.b32.xlu0 %v357, 70
  %v1659 = vpop.permute.xlu0 %1658
  %1660 = vrot.lane.b32.xlu0 %v358, 70
  %v1661 = vpop.permute.xlu0 %1660
  %1662 = vrot.lane.b32.xlu0 %v359, 70
  %v1663 = vpop.permute.xlu0 %1662
  %1664 = vrot.lane.b32.xlu0 %v360, 70
  %v1665 = vpop.permute.xlu0 %1664
  %1666 = vrot.lane.b32.xlu0 %v361, 70
  %v1667 = vpop.permute.xlu0 %1666
  %1668 = vrot.lane.b32.xlu0 %v362, 70
  %v1669 = vpop.permute.xlu0 %1668
  %1670 = vrot.lane.b32.xlu0 %v363, 70
  %v1671 = vpop.permute.xlu0 %1670
  %1672 = vrot.lane.b32.xlu0 %v364, 70
  %v1673 = vpop.permute.xlu0 %1672
  %1674 = vrot.lane.b32.xlu0 %v365, 70
  %v1675 = vpop.permute.xlu0 %1674
  %1676 = vrot.lane.b32.xlu0 %v366, 70
  %v1677 = vpop.permute.xlu0 %1676
  %1678 = vrot.lane.b32.xlu0 %v367, 70
  %v1679 = vpop.permute.xlu0 %1678
  %1680 = vrot.lane.b32.xlu0 %v368, 70
  %v1681 = vpop.permute.xlu0 %1680
  %1682 = vrot.lane.b32.xlu0 %v369, 70
  %v1683 = vpop.permute.xlu0 %1682
  %1684 = vrot.lane.b32.xlu0 %v370, 70
  %v1685 = vpop.permute.xlu0 %1684
  %1686 = vrot.lane.b32.xlu0 %v371, 70
  %v1687 = vpop.permute.xlu0 %1686
  %1688 = vrot.lane.b32.xlu0 %v372, 70
  %v1689 = vpop.permute.xlu0 %1688
  %1690 = vrot.lane.b32.xlu0 %v373, 70
  %v1691 = vpop.permute.xlu0 %1690
  %1692 = vrot.lane.b32.xlu0 %v374, 70
  %v1693 = vpop.permute.xlu0 %1692
  %1694 = vrot.lane.b32.xlu0 %v375, 70
  %v1695 = vpop.permute.xlu0 %1694
  %1696 = vrot.lane.b32.xlu0 %v376, 70
  %v1697 = vpop.permute.xlu0 %1696
  %1698 = vrot.lane.b32.xlu0 %v377, 70
  %v1699 = vpop.permute.xlu0 %1698
  %1700 = vrot.lane.b32.xlu0 %v378, 70
  %v1701 = vpop.permute.xlu0 %1700
  %1702 = vrot.lane.b32.xlu0 %v379, 70
  %v1703 = vpop.permute.xlu0 %1702
  %1704 = vrot.lane.b32.xlu0 %v380, 70
  %v1705 = vpop.permute.xlu0 %1704
  %1706 = vrot.lane.b32.xlu0 %v381, 70
  %v1707 = vpop.permute.xlu0 %1706
  %1708 = vrot.lane.b32.xlu0 %v382, 70
  %v1709 = vpop.permute.xlu0 %1708
  %1710 = vrot.lane.b32.xlu0 %v383, 70
  %v1711 = vpop.permute.xlu0 %1710
  %1712 = vrot.lane.b32.xlu0 %v384, 70
  %v1713 = vpop.permute.xlu0 %1712
  %1714 = vrot.lane.b32.xlu0 %v385, 70
  %v1715 = vpop.permute.xlu0 %1714
  %1716 = vrot.lane.b32.xlu0 %v386, 70
  %v1717 = vpop.permute.xlu0 %1716
  %1718 = vrot.lane.b32.xlu0 %v387, 70
  %v1719 = vpop.permute.xlu0 %1718
  %1720 = vrot.lane.b32.xlu0 %v388, 70
  %v1721 = vpop.permute.xlu0 %1720
  %1722 = vrot.lane.b32.xlu0 %v389, 70
  %v1723 = vpop.permute.xlu0 %1722
  %1724 = vrot.lane.b32.xlu0 %v390, 70
  %v1725 = vpop.permute.xlu0 %1724
  %1726 = vrot.lane.b32.xlu0 %v391, 70
  %v1727 = vpop.permute.xlu0 %1726
  %1728 = vrot.lane.b32.xlu0 %v392, 70
  %v1729 = vpop.permute.xlu0 %1728
  %1730 = vrot.lane.b32.xlu0 %v393, 70
  %v1731 = vpop.permute.xlu0 %1730
  %1732 = vrot.lane.b32.xlu0 %v394, 70
  %v1733 = vpop.permute.xlu0 %1732
  %1734 = vrot.lane.b32.xlu0 %v395, 70
  %v1735 = vpop.permute.xlu0 %1734
  %1736 = vrot.lane.b32.xlu0 %v396, 70
  %v1737 = vpop.permute.xlu0 %1736
  %1738 = vrot.lane.b32.xlu0 %v397, 70
  %v1739 = vpop.permute.xlu0 %1738
  %1740 = vrot.lane.b32.xlu0 %v398, 70
  %v1741 = vpop.permute.xlu0 %1740
  %1742 = vrot.lane.b32.xlu0 %v399, 70
  %v1743 = vpop.permute.xlu0 %1742
  %1840 = vrot.lane.b32.xlu0 %v400, 80
  %v1841 = vpop.permute.xlu0 %1840
  %1842 = vrot.lane.b32.xlu0 %v401, 80
  %v1843 = vpop.permute.xlu0 %1842
  %1844 = vrot.lane.b32.xlu0 %v402, 80
  %v1845 = vpop.permute.xlu0 %1844
  %1846 = vrot.lane.b32.xlu0 %v403, 80
  %v1847 = vpop.permute.xlu0 %1846
  %1848 = vrot.lane.b32.xlu0 %v404, 80
  %v1849 = vpop.permute.xlu0 %1848
  %1850 = vrot.lane.b32.xlu0 %v405, 80
  %v1851 = vpop.permute.xlu0 %1850
  %1852 = vrot.lane.b32.xlu0 %v406, 80
  %v1853 = vpop.permute.xlu0 %1852
  %1854 = vrot.lane.b32.xlu0 %v407, 80
  %v1855 = vpop.permute.xlu0 %1854
  %1856 = vrot.lane.b32.xlu0 %v408, 80
  %v1857 = vpop.permute.xlu0 %1856
  %1858 = vrot.lane.b32.xlu0 %v409, 80
  %v1859 = vpop.permute.xlu0 %1858
  %1860 = vrot.lane.b32.xlu0 %v410, 80
  %v1861 = vpop.permute.xlu0 %1860
  %1862 = vrot.lane.b32.xlu0 %v411, 80
  %v1863 = vpop.permute.xlu0 %1862
  %1864 = vrot.lane.b32.xlu0 %v412, 80
  %v1865 = vpop.permute.xlu0 %1864
  %1866 = vrot.lane.b32.xlu0 %v413, 80
  %v1867 = vpop.permute.xlu0 %1866
  %1868 = vrot.lane.b32.xlu0 %v414, 80
  %v1869 = vpop.permute.xlu0 %1868
  %1870 = vrot.lane.b32.xlu0 %v415, 80
  %v1871 = vpop.permute.xlu0 %1870
  %1872 = vrot.lane.b32.xlu0 %v416, 80
  %v1873 = vpop.permute.xlu0 %1872
  %1874 = vrot.lane.b32.xlu0 %v417, 80
  %v1875 = vpop.permute.xlu0 %1874
  %1876 = vrot.lane.b32.xlu0 %v418, 80
  %v1877 = vpop.permute.xlu0 %1876
  %1878 = vrot.lane.b32.xlu0 %v419, 80
  %v1879 = vpop.permute.xlu0 %1878
  %1880 = vrot.lane.b32.xlu0 %v420, 80
  %v1881 = vpop.permute.xlu0 %1880
  %1882 = vrot.lane.b32.xlu0 %v421, 80
  %v1883 = vpop.permute.xlu0 %1882
  %1884 = vrot.lane.b32.xlu0 %v422, 80
  %v1885 = vpop.permute.xlu0 %1884
  %1886 = vrot.lane.b32.xlu0 %v423, 80
  %v1887 = vpop.permute.xlu0 %1886
  %1888 = vrot.lane.b32.xlu0 %v424, 80
  %v1889 = vpop.permute.xlu0 %1888
  %1890 = vrot.lane.b32.xlu0 %v425, 80
  %v1891 = vpop.permute.xlu0 %1890
  %1892 = vrot.lane.b32.xlu0 %v426, 80
  %v1893 = vpop.permute.xlu0 %1892
  %1894 = vrot.lane.b32.xlu0 %v427, 80
  %v1895 = vpop.permute.xlu0 %1894
  %1896 = vrot.lane.b32.xlu0 %v428, 80
  %v1897 = vpop.permute.xlu0 %1896
  %1898 = vrot.lane.b32.xlu0 %v429, 80
  %v1899 = vpop.permute.xlu0 %1898
  %1900 = vrot.lane.b32.xlu0 %v430, 80
  %v1901 = vpop.permute.xlu0 %1900
  %1902 = vrot.lane.b32.xlu0 %v431, 80
  %v1903 = vpop.permute.xlu0 %1902
  %1904 = vrot.lane.b32.xlu0 %v432, 80
  %v1905 = vpop.permute.xlu0 %1904
  %1906 = vrot.lane.b32.xlu0 %v433, 80
  %v1907 = vpop.permute.xlu0 %1906
  %1908 = vrot.lane.b32.xlu0 %v434, 80
  %v1909 = vpop.permute.xlu0 %1908
  %1910 = vrot.lane.b32.xlu0 %v435, 80
  %v1911 = vpop.permute.xlu0 %1910
  %1912 = vrot.lane.b32.xlu0 %v436, 80
  %v1913 = vpop.permute.xlu0 %1912
  %1914 = vrot.lane.b32.xlu0 %v437, 80
  %v1915 = vpop.permute.xlu0 %1914
  %1916 = vrot.lane.b32.xlu0 %v438, 80
  %v1917 = vpop.permute.xlu0 %1916
  %1918 = vrot.lane.b32.xlu0 %v439, 80
  %v1919 = vpop.permute.xlu0 %1918
  %1920 = vrot.lane.b32.xlu0 %v440, 80
  %v1921 = vpop.permute.xlu0 %1920
  %1922 = vrot.lane.b32.xlu0 %v441, 80
  %v1923 = vpop.permute.xlu0 %1922
  %1924 = vrot.lane.b32.xlu0 %v442, 80
  %v1925 = vpop.permute.xlu0 %1924
  %1926 = vrot.lane.b32.xlu0 %v443, 80
  %v1927 = vpop.permute.xlu0 %1926
  %1928 = vrot.lane.b32.xlu0 %v444, 80
  %v1929 = vpop.permute.xlu0 %1928
  %1930 = vrot.lane.b32.xlu0 %v445, 80
  %v1931 = vpop.permute.xlu0 %1930
  %1932 = vrot.lane.b32.xlu0 %v446, 80
  %v1933 = vpop.permute.xlu0 %1932
  %1934 = vrot.lane.b32.xlu0 %v447, 80
  %v1935 = vpop.permute.xlu0 %1934
  %vm1984 = vcmask 80896
  %v1985 = vsel %vm1984, %v14, %v497
  %v1986 = vsel %vm1984, %v15, %v499
  %v1987 = vsel %vm1984, %v16, %v501
  %v1988 = vsel %vm1984, %v17, %v503
  %v1989 = vsel %vm1984, %v18, %v505
  %v1990 = vsel %vm1984, %v19, %v507
  %v1991 = vsel %vm1984, %v20, %v509
  %v1992 = vsel %vm1984, %v21, %v511
  %v1993 = vsel %vm1984, %v22, %v513
  %v1994 = vsel %vm1984, %v23, %v515
  %v1995 = vsel %vm1984, %v24, %v517
  %v1996 = vsel %vm1984, %v25, %v519
  %v1997 = vsel %vm1984, %v26, %v521
  %v1998 = vsel %vm1984, %v27, %v523
  %v1999 = vsel %vm1984, %v28, %v525
  %v2000 = vsel %vm1984, %v29, %v527
  %v2001 = vsel %vm1984, %v30, %v529
  %v2002 = vsel %vm1984, %v31, %v531
  %v2003 = vsel %vm1984, %v32, %v533
  %v2004 = vsel %vm1984, %v33, %v535
  %v2005 = vsel %vm1984, %v34, %v537
  %v2006 = vsel %vm1984, %v35, %v539
  %v2007 = vsel %vm1984, %v36, %v541
  %v2008 = vsel %vm1984, %v37, %v543
  %v2009 = vsel %vm1984, %v38, %v545
  %v2010 = vsel %vm1984, %v39, %v547
  %v2011 = vsel %vm1984, %v40, %v549
  %v2012 = vsel %vm1984, %v41, %v551
  %v2013 = vsel %vm1984, %v42, %v553
  %v2014 = vsel %vm1984, %v43, %v555
  %v2015 = vsel %vm1984, %v44, %v557
  %v2016 = vsel %vm1984, %v45, %v559
  %v2017 = vsel %vm1984, %v46, %v561
  %v2018 = vsel %vm1984, %v47, %v563
  %v2019 = vsel %vm1984, %v48, %v565
  %v2020 = vsel %vm1984, %v49, %v567
  %v2021 = vsel %vm1984, %v50, %v569
  %v2022 = vsel %vm1984, %v51, %v571
  %v2023 = vsel %vm1984, %v52, %v573
  %v2024 = vsel %vm1984, %v53, %v575
  %v2025 = vsel %vm1984, %v54, %v577
  %v2026 = vsel %vm1984, %v55, %v579
  %v2027 = vsel %vm1984, %v56, %v581
  %v2028 = vsel %vm1984, %v57, %v583
  %v2029 = vsel %vm1984, %v58, %v585
  %v2030 = vsel %vm1984, %v59, %v587
  %v2031 = vsel %vm1984, %v60, %v589
  %v2032 = vsel %vm1984, %v61, %v591
  %vm2033 = vcmask 162816
  %v2034 = vsel %vm2033, %v1985, %v689
  %v2035 = vsel %vm2033, %v1986, %v691
  %v2036 = vsel %vm2033, %v1987, %v693
  %v2037 = vsel %vm2033, %v1988, %v695
  %v2038 = vsel %vm2033, %v1989, %v697
  %v2039 = vsel %vm2033, %v1990, %v699
  %v2040 = vsel %vm2033, %v1991, %v701
  %v2041 = vsel %vm2033, %v1992, %v703
  %v2042 = vsel %vm2033, %v1993, %v705
  %v2043 = vsel %vm2033, %v1994, %v707
  %v2044 = vsel %vm2033, %v1995, %v709
  %v2045 = vsel %vm2033, %v1996, %v711
  %v2046 = vsel %vm2033, %v1997, %v713
  %v2047 = vsel %vm2033, %v1998, %v715
  %v2048 = vsel %vm2033, %v1999, %v717
  %v2049 = vsel %vm2033, %v2000, %v719
  %v2050 = vsel %vm2033, %v2001, %v721
  %v2051 = vsel %vm2033, %v2002, %v723
  %v2052 = vsel %vm2033, %v2003, %v725
  %v2053 = vsel %vm2033, %v2004, %v727
  %v2054 = vsel %vm2033, %v2005, %v729
  %v2055 = vsel %vm2033, %v2006, %v731
  %v2056 = vsel %vm2033, %v2007, %v733
  %v2057 = vsel %vm2033, %v2008, %v735
  %v2058 = vsel %vm2033, %v2009, %v737
  %v2059 = vsel %vm2033, %v2010, %v739
  %v2060 = vsel %vm2033, %v2011, %v741
  %v2061 = vsel %vm2033, %v2012, %v743
  %v2062 = vsel %vm2033, %v2013, %v745
  %v2063 = vsel %vm2033, %v2014, %v747
  %v2064 = vsel %vm2033, %v2015, %v749
  %v2065 = vsel %vm2033, %v2016, %v751
  %v2066 = vsel %vm2033, %v2017, %v753
  %v2067 = vsel %vm2033, %v2018, %v755
  %v2068 = vsel %vm2033, %v2019, %v757
  %v2069 = vsel %vm2033, %v2020, %v759
  %v2070 = vsel %vm2033, %v2021, %v761
  %v2071 = vsel %vm2033, %v2022, %v763
  %v2072 = vsel %vm2033, %v2023, %v765
  %v2073 = vsel %vm2033, %v2024, %v767
  %v2074 = vsel %vm2033, %v2025, %v769
  %v2075 = vsel %vm2033, %v2026, %v771
  %v2076 = vsel %vm2033, %v2027, %v773
  %v2077 = vsel %vm2033, %v2028, %v775
  %v2078 = vsel %vm2033, %v2029, %v777
  %v2079 = vsel %vm2033, %v2030, %v779
  %v2080 = vsel %vm2033, %v2031, %v781
  %v2081 = vsel %vm2033, %v2032, %v783
  %vm2082 = vcmask 244736
  %v2083 = vsel %vm2082, %v2034, %v881
  %v2084 = vsel %vm2082, %v2035, %v883
  %v2085 = vsel %vm2082, %v2036, %v885
  %v2086 = vsel %vm2082, %v2037, %v887
  %v2087 = vsel %vm2082, %v2038, %v889
  %v2088 = vsel %vm2082, %v2039, %v891
  %v2089 = vsel %vm2082, %v2040, %v893
  %v2090 = vsel %vm2082, %v2041, %v895
  %v2091 = vsel %vm2082, %v2042, %v897
  %v2092 = vsel %vm2082, %v2043, %v899
  %v2093 = vsel %vm2082, %v2044, %v901
  %v2094 = vsel %vm2082, %v2045, %v903
  %v2095 = vsel %vm2082, %v2046, %v905
  %v2096 = vsel %vm2082, %v2047, %v907
  %v2097 = vsel %vm2082, %v2048, %v909
  %v2098 = vsel %vm2082, %v2049, %v911
  %v2099 = vsel %vm2082, %v2050, %v913
  %v2100 = vsel %vm2082, %v2051, %v915
  %v2101 = vsel %vm2082, %v2052, %v917
  %v2102 = vsel %vm2082, %v2053, %v919
  %v2103 = vsel %vm2082, %v2054, %v921
  %v2104 = vsel %vm2082, %v2055, %v923
  %v2105 = vsel %vm2082, %v2056, %v925
  %v2106 = vsel %vm2082, %v2057, %v927
  %v2107 = vsel %vm2082, %v2058, %v929
  %v2108 = vsel %vm2082, %v2059, %v931
  %v2109 = vsel %vm2082, %v2060, %v933
  %v2110 = vsel %vm2082, %v2061, %v935
  %v2111 = vsel %vm2082, %v2062, %v937
  %v2112 = vsel %vm2082, %v2063, %v939
  %v2113 = vsel %vm2082, %v2064, %v941
  %v2114 = vsel %vm2082, %v2065, %v943
  %v2115 = vsel %vm2082, %v2066, %v945
  %v2116 = vsel %vm2082, %v2067, %v947
  %v2117 = vsel %vm2082, %v2068, %v949
  %v2118 = vsel %vm2082, %v2069, %v951
  %v2119 = vsel %vm2082, %v2070, %v953
  %v2120 = vsel %vm2082, %v2071, %v955
  %v2121 = vsel %vm2082, %v2072, %v957
  %v2122 = vsel %vm2082, %v2073, %v959
  %v2123 = vsel %vm2082, %v2074, %v961
  %v2124 = vsel %vm2082, %v2075, %v963
  %v2125 = vsel %vm2082, %v2076, %v965
  %v2126 = vsel %vm2082, %v2077, %v967
  %v2127 = vsel %vm2082, %v2078, %v969
  %v2128 = vsel %vm2082, %v2079, %v971
  %v2129 = vsel %vm2082, %v2080, %v973
  %v2130 = vsel %vm2082, %v2081, %v975
  %vm2131 = vcmask 326656
  %v2132 = vsel %vm2131, %v2083, %v1073
  %v2133 = vsel %vm2131, %v2084, %v1075
  %v2134 = vsel %vm2131, %v2085, %v1077
  %v2135 = vsel %vm2131, %v2086, %v1079
  %v2136 = vsel %vm2131, %v2087, %v1081
  %v2137 = vsel %vm2131, %v2088, %v1083
  %v2138 = vsel %vm2131, %v2089, %v1085
  %v2139 = vsel %vm2131, %v2090, %v1087
  %v2140 = vsel %vm2131, %v2091, %v1089
  %v2141 = vsel %vm2131, %v2092, %v1091
  %v2142 = vsel %vm2131, %v2093, %v1093
  %v2143 = vsel %vm2131, %v2094, %v1095
  %v2144 = vsel %vm2131, %v2095, %v1097
  %v2145 = vsel %vm2131, %v2096, %v1099
  %v2146 = vsel %vm2131, %v2097, %v1101
  %v2147 = vsel %vm2131, %v2098, %v1103
  %v2148 = vsel %vm2131, %v2099, %v1105
  %v2149 = vsel %vm2131, %v2100, %v1107
  %v2150 = vsel %vm2131, %v2101, %v1109
  %v2151 = vsel %vm2131, %v2102, %v1111
  %v2152 = vsel %vm2131, %v2103, %v1113
  %v2153 = vsel %vm2131, %v2104, %v1115
  %v2154 = vsel %vm2131, %v2105, %v1117
  %v2155 = vsel %vm2131, %v2106, %v1119
  %v2156 = vsel %vm2131, %v2107, %v1121
  %v2157 = vsel %vm2131, %v2108, %v1123
  %v2158 = vsel %vm2131, %v2109, %v1125
  %v2159 = vsel %vm2131, %v2110, %v1127
  %v2160 = vsel %vm2131, %v2111, %v1129
  %v2161 = vsel %vm2131, %v2112, %v1131
  %v2162 = vsel %vm2131, %v2113, %v1133
  %v2163 = vsel %vm2131, %v2114, %v1135
  %v2164 = vsel %vm2131, %v2115, %v1137
  %v2165 = vsel %vm2131, %v2116, %v1139
  %v2166 = vsel %vm2131, %v2117, %v1141
  %v2167 = vsel %vm2131, %v2118, %v1143
  %v2168 = vsel %vm2131, %v2119, %v1145
  %v2169 = vsel %vm2131, %v2120, %v1147
  %v2170 = vsel %vm2131, %v2121, %v1149
  %v2171 = vsel %vm2131, %v2122, %v1151
  %v2172 = vsel %vm2131, %v2123, %v1153
  %v2173 = vsel %vm2131, %v2124, %v1155
  %v2174 = vsel %vm2131, %v2125, %v1157
  %v2175 = vsel %vm2131, %v2126, %v1159
  %v2176 = vsel %vm2131, %v2127, %v1161
  %v2177 = vsel %vm2131, %v2128, %v1163
  %v2178 = vsel %vm2131, %v2129, %v1165
  %v2179 = vsel %vm2131, %v2130, %v1167
  %vm2180 = vcmask 408576
  %v2181 = vsel %vm2180, %v2132, %v1265
  %v2182 = vsel %vm2180, %v2133, %v1267
  %v2183 = vsel %vm2180, %v2134, %v1269
  %v2184 = vsel %vm2180, %v2135, %v1271
  %v2185 = vsel %vm2180, %v2136, %v1273
  %v2186 = vsel %vm2180, %v2137, %v1275
  %v2187 = vsel %vm2180, %v2138, %v1277
  %v2188 = vsel %vm2180, %v2139, %v1279
  %v2189 = vsel %vm2180, %v2140, %v1281
  %v2190 = vsel %vm2180, %v2141, %v1283
  %v2191 = vsel %vm2180, %v2142, %v1285
  %v2192 = vsel %vm2180, %v2143, %v1287
  %v2193 = vsel %vm2180, %v2144, %v1289
  %v2194 = vsel %vm2180, %v2145, %v1291
  %v2195 = vsel %vm2180, %v2146, %v1293
  %v2196 = vsel %vm2180, %v2147, %v1295
  %v2197 = vsel %vm2180, %v2148, %v1297
  %v2198 = vsel %vm2180, %v2149, %v1299
  %v2199 = vsel %vm2180, %v2150, %v1301
  %v2200 = vsel %vm2180, %v2151, %v1303
  %v2201 = vsel %vm2180, %v2152, %v1305
  %v2202 = vsel %vm2180, %v2153, %v1307
  %v2203 = vsel %vm2180, %v2154, %v1309
  %v2204 = vsel %vm2180, %v2155, %v1311
  %v2205 = vsel %vm2180, %v2156, %v1313
  %v2206 = vsel %vm2180, %v2157, %v1315
  %v2207 = vsel %vm2180, %v2158, %v1317
  %v2208 = vsel %vm2180, %v2159, %v1319
  %v2209 = vsel %vm2180, %v2160, %v1321
  %v2210 = vsel %vm2180, %v2161, %v1323
  %v2211 = vsel %vm2180, %v2162, %v1325
  %v2212 = vsel %vm2180, %v2163, %v1327
  %v2213 = vsel %vm2180, %v2164, %v1329
  %v2214 = vsel %vm2180, %v2165, %v1331
  %v2215 = vsel %vm2180, %v2166, %v1333
  %v2216 = vsel %vm2180, %v2167, %v1335
  %v2217 = vsel %vm2180, %v2168, %v1337
  %v2218 = vsel %vm2180, %v2169, %v1339
  %v2219 = vsel %vm2180, %v2170, %v1341
  %v2220 = vsel %vm2180, %v2171, %v1343
  %v2221 = vsel %vm2180, %v2172, %v1345
  %v2222 = vsel %vm2180, %v2173, %v1347
  %v2223 = vsel %vm2180, %v2174, %v1349
  %v2224 = vsel %vm2180, %v2175, %v1351
  %v2225 = vsel %vm2180, %v2176, %v1353
  %v2226 = vsel %vm2180, %v2177, %v1355
  %v2227 = vsel %vm2180, %v2178, %v1357
  %v2228 = vsel %vm2180, %v2179, %v1359
  %vm2229 = vcmask 490496
  %v2230 = vsel %vm2229, %v2181, %v1457
  %v2231 = vsel %vm2229, %v2182, %v1459
  %v2232 = vsel %vm2229, %v2183, %v1461
  %v2233 = vsel %vm2229, %v2184, %v1463
  %v2234 = vsel %vm2229, %v2185, %v1465
  %v2235 = vsel %vm2229, %v2186, %v1467
  %v2236 = vsel %vm2229, %v2187, %v1469
  %v2237 = vsel %vm2229, %v2188, %v1471
  %v2238 = vsel %vm2229, %v2189, %v1473
  %v2239 = vsel %vm2229, %v2190, %v1475
  %v2240 = vsel %vm2229, %v2191, %v1477
  %v2241 = vsel %vm2229, %v2192, %v1479
  %v2242 = vsel %vm2229, %v2193, %v1481
  %v2243 = vsel %vm2229, %v2194, %v1483
  %v2244 = vsel %vm2229, %v2195, %v1485
  %v2245 = vsel %vm2229, %v2196, %v1487
  %v2246 = vsel %vm2229, %v2197, %v1489
  %v2247 = vsel %vm2229, %v2198, %v1491
  %v2248 = vsel %vm2229, %v2199, %v1493
  %v2249 = vsel %vm2229, %v2200, %v1495
  %v2250 = vsel %vm2229, %v2201, %v1497
  %v2251 = vsel %vm2229, %v2202, %v1499
  %v2252 = vsel %vm2229, %v2203, %v1501
  %v2253 = vsel %vm2229, %v2204, %v1503
  %v2254 = vsel %vm2229, %v2205, %v1505
  %v2255 = vsel %vm2229, %v2206, %v1507
  %v2256 = vsel %vm2229, %v2207, %v1509
  %v2257 = vsel %vm2229, %v2208, %v1511
  %v2258 = vsel %vm2229, %v2209, %v1513
  %v2259 = vsel %vm2229, %v2210, %v1515
  %v2260 = vsel %vm2229, %v2211, %v1517
  %v2261 = vsel %vm2229, %v2212, %v1519
  %v2262 = vsel %vm2229, %v2213, %v1521
  %v2263 = vsel %vm2229, %v2214, %v1523
  %v2264 = vsel %vm2229, %v2215, %v1525
  %v2265 = vsel %vm2229, %v2216, %v1527
  %v2266 = vsel %vm2229, %v2217, %v1529
  %v2267 = vsel %vm2229, %v2218, %v1531
  %v2268 = vsel %vm2229, %v2219, %v1533
  %v2269 = vsel %vm2229, %v2220, %v1535
  %v2270 = vsel %vm2229, %v2221, %v1537
  %v2271 = vsel %vm2229, %v2222, %v1539
  %v2272 = vsel %vm2229, %v2223, %v1541
  %v2273 = vsel %vm2229, %v2224, %v1543
  %v2274 = vsel %vm2229, %v2225, %v1545
  %v2275 = vsel %vm2229, %v2226, %v1547
  %v2276 = vsel %vm2229, %v2227, %v1549
  %v2277 = vsel %vm2229, %v2228, %v1551
  %vm2278 = vcmask 572416
  %v2279 = vsel %vm2278, %v2230, %v1649
  %v2280 = vsel %vm2278, %v2231, %v1651
  %v2281 = vsel %vm2278, %v2232, %v1653
  %v2282 = vsel %vm2278, %v2233, %v1655
  %v2283 = vsel %vm2278, %v2234, %v1657
  %v2284 = vsel %vm2278, %v2235, %v1659
  %v2285 = vsel %vm2278, %v2236, %v1661
  %v2286 = vsel %vm2278, %v2237, %v1663
  %v2287 = vsel %vm2278, %v2238, %v1665
  %v2288 = vsel %vm2278, %v2239, %v1667
  %v2289 = vsel %vm2278, %v2240, %v1669
  %v2290 = vsel %vm2278, %v2241, %v1671
  %v2291 = vsel %vm2278, %v2242, %v1673
  %v2292 = vsel %vm2278, %v2243, %v1675
  %v2293 = vsel %vm2278, %v2244, %v1677
  %v2294 = vsel %vm2278, %v2245, %v1679
  %v2295 = vsel %vm2278, %v2246, %v1681
  %v2296 = vsel %vm2278, %v2247, %v1683
  %v2297 = vsel %vm2278, %v2248, %v1685
  %v2298 = vsel %vm2278, %v2249, %v1687
  %v2299 = vsel %vm2278, %v2250, %v1689
  %v2300 = vsel %vm2278, %v2251, %v1691
  %v2301 = vsel %vm2278, %v2252, %v1693
  %v2302 = vsel %vm2278, %v2253, %v1695
  %v2303 = vsel %vm2278, %v2254, %v1697
  %v2304 = vsel %vm2278, %v2255, %v1699
  %v2305 = vsel %vm2278, %v2256, %v1701
  %v2306 = vsel %vm2278, %v2257, %v1703
  %v2307 = vsel %vm2278, %v2258, %v1705
  %v2308 = vsel %vm2278, %v2259, %v1707
  %v2309 = vsel %vm2278, %v2260, %v1709
  %v2310 = vsel %vm2278, %v2261, %v1711
  %v2311 = vsel %vm2278, %v2262, %v1713
  %v2312 = vsel %vm2278, %v2263, %v1715
  %v2313 = vsel %vm2278, %v2264, %v1717
  %v2314 = vsel %vm2278, %v2265, %v1719
  %v2315 = vsel %vm2278, %v2266, %v1721
  %v2316 = vsel %vm2278, %v2267, %v1723
  %v2317 = vsel %vm2278, %v2268, %v1725
  %v2318 = vsel %vm2278, %v2269, %v1727
  %v2319 = vsel %vm2278, %v2270, %v1729
  %v2320 = vsel %vm2278, %v2271, %v1731
  %v2321 = vsel %vm2278, %v2272, %v1733
  %v2322 = vsel %vm2278, %v2273, %v1735
  %v2323 = vsel %vm2278, %v2274, %v1737
  %v2324 = vsel %vm2278, %v2275, %v1739
  %v2325 = vsel %vm2278, %v2276, %v1741
  %v2326 = vsel %vm2278, %v2277, %v1743
  %vm2327 = vcmask 654336
  %v2328 = vsel %vm2327, %v2279, %v1841
  %v2329 = vsel %vm2327, %v2280, %v1843
  %v2330 = vsel %vm2327, %v2281, %v1845
  %v2331 = vsel %vm2327, %v2282, %v1847
  %v2332 = vsel %vm2327, %v2283, %v1849
  %v2333 = vsel %vm2327, %v2284, %v1851
  %v2334 = vsel %vm2327, %v2285, %v1853
  %v2335 = vsel %vm2327, %v2286, %v1855
  %v2336 = vsel %vm2327, %v2287, %v1857
  %v2337 = vsel %vm2327, %v2288, %v1859
  %v2338 = vsel %vm2327, %v2289, %v1861
  %v2339 = vsel %vm2327, %v2290, %v1863
  %v2340 = vsel %vm2327, %v2291, %v1865
  %v2341 = vsel %vm2327, %v2292, %v1867
  %v2342 = vsel %vm2327, %v2293, %v1869
  %v2343 = vsel %vm2327, %v2294, %v1871
  %v2344 = vsel %vm2327, %v2295, %v1873
  %v2345 = vsel %vm2327, %v2296, %v1875
  %v2346 = vsel %vm2327, %v2297, %v1877
  %v2347 = vsel %vm2327, %v2298, %v1879
  %v2348 = vsel %vm2327, %v2299, %v1881
  %v2349 = vsel %vm2327, %v2300, %v1883
  %v2350 = vsel %vm2327, %v2301, %v1885
  %v2351 = vsel %vm2327, %v2302, %v1887
  %v2352 = vsel %vm2327, %v2303, %v1889
  %v2353 = vsel %vm2327, %v2304, %v1891
  %v2354 = vsel %vm2327, %v2305, %v1893
  %v2355 = vsel %vm2327, %v2306, %v1895
  %v2356 = vsel %vm2327, %v2307, %v1897
  %v2357 = vsel %vm2327, %v2308, %v1899
  %v2358 = vsel %vm2327, %v2309, %v1901
  %v2359 = vsel %vm2327, %v2310, %v1903
  %v2360 = vsel %vm2327, %v2311, %v1905
  %v2361 = vsel %vm2327, %v2312, %v1907
  %v2362 = vsel %vm2327, %v2313, %v1909
  %v2363 = vsel %vm2327, %v2314, %v1911
  %v2364 = vsel %vm2327, %v2315, %v1913
  %v2365 = vsel %vm2327, %v2316, %v1915
  %v2366 = vsel %vm2327, %v2317, %v1917
  %v2367 = vsel %vm2327, %v2318, %v1919
  %v2368 = vsel %vm2327, %v2319, %v1921
  %v2369 = vsel %vm2327, %v2320, %v1923
  %v2370 = vsel %vm2327, %v2321, %v1925
  %v2371 = vsel %vm2327, %v2322, %v1927
  %v2372 = vsel %vm2327, %v2323, %v1929
  %v2373 = vsel %vm2327, %v2324, %v1931
  %v2374 = vsel %vm2327, %v2325, %v1933
  %v2375 = vsel %vm2327, %v2326, %v1935
  %vm2376 = vcmask 736256
  %v2377 = vsel %vm2376, %v2328, 0.0
  %v2378 = vsel %vm2376, %v2329, 0.0
  %v2379 = vsel %vm2376, %v2330, 0.0
  %v2380 = vsel %vm2376, %v2331, 0.0
  %v2381 = vsel %vm2376, %v2332, 0.0
  %v2382 = vsel %vm2376, %v2333, 0.0
  %v2383 = vsel %vm2376, %v2334, 0.0
  %v2384 = vsel %vm2376, %v2335, 0.0
  %v2385 = vsel %vm2376, %v2336, 0.0
  %v2386 = vsel %vm2376, %v2337, 0.0
  %v2387 = vsel %vm2376, %v2338, 0.0
  %v2388 = vsel %vm2376, %v2339, 0.0
  %v2389 = vsel %vm2376, %v2340, 0.0
  %v2390 = vsel %vm2376, %v2341, 0.0
  %v2391 = vsel %vm2376, %v2342, 0.0
  %v2392 = vsel %vm2376, %v2343, 0.0
  %v2393 = vsel %vm2376, %v2344, 0.0
  %v2394 = vsel %vm2376, %v2345, 0.0
  %v2395 = vsel %vm2376, %v2346, 0.0
  %v2396 = vsel %vm2376, %v2347, 0.0
  %v2397 = vsel %vm2376, %v2348, 0.0
  %v2398 = vsel %vm2376, %v2349, 0.0
  %v2399 = vsel %vm2376, %v2350, 0.0
  %v2400 = vsel %vm2376, %v2351, 0.0
  %v2401 = vsel %vm2376, %v2352, 0.0
  %v2402 = vsel %vm2376, %v2353, 0.0
  %v2403 = vsel %vm2376, %v2354, 0.0
  %v2404 = vsel %vm2376, %v2355, 0.0
  %v2405 = vsel %vm2376, %v2356, 0.0
  %v2406 = vsel %vm2376, %v2357, 0.0
  %v2407 = vsel %vm2376, %v2358, 0.0
  %v2408 = vsel %vm2376, %v2359, 0.0
  %v2409 = vsel %vm2376, %v2360, 0.0
  %v2410 = vsel %vm2376, %v2361, 0.0
  %v2411 = vsel %vm2376, %v2362, 0.0
  %v2412 = vsel %vm2376, %v2363, 0.0
  %v2413 = vsel %vm2376, %v2364, 0.0
  %v2414 = vsel %vm2376, %v2365, 0.0
  %v2415 = vsel %vm2376, %v2366, 0.0
  %v2416 = vsel %vm2376, %v2367, 0.0
  %v2417 = vsel %vm2376, %v2368, 0.0
  %v2418 = vsel %vm2376, %v2369, 0.0
  %v2419 = vsel %vm2376, %v2370, 0.0
  %v2420 = vsel %vm2376, %v2371, 0.0
  %v2421 = vsel %vm2376, %v2372, 0.0
  %v2422 = vsel %vm2376, %v2373, 0.0
  %v2423 = vsel %vm2376, %v2374, 0.0
  %v2424 = vsel %vm2376, %v2375, 0.0
  %v2425 = vld [vmem:[%s1] sm:$0xff]
  %v2426 = vld [vmem:[%s1 + $0x8] sm:$0xff]
  %v2427 = vld [vmem:[%s1 + $0x10] sm:$0xff]
  %v2428 = vld [vmem:[%s1 + $0x18] sm:$0xff]
  %v2429 = vld [vmem:[%s1 + $0x20] sm:$0xff]
  %v2430 = vld [vmem:[%s1 + $0x28] sm:$0xff]
  %v2431 = vld [vmem:[%s1 + $0x30] sm:$0xff]
  %v2432 = vld [vmem:[%s1 + $0x38] sm:$0xff]
  %v2433 = vld [vmem:[%s1 + $0x40] sm:$0xff]
  %v2434 = vld [vmem:[%s1 + $0x48] sm:$0xff]
  %v2435 = vld [vmem:[%s1 + $0x50] sm:$0xff]
  %v2436 = vld [vmem:[%s1 + $0x58] sm:$0xff]
  %v2437 = vld [vmem:[%s1 + $0x60] sm:$0xff]
  %v2438 = vld [vmem:[%s1 + $0x68] sm:$0xff]
  %v2439 = vld [vmem:[%s1 + $0x70] sm:$0xff]
  %v2440 = vld [vmem:[%s1 + $0x78] sm:$0xff]
  %v2441 = vld [vmem:[%s2] sm:$0x1]
  %v2443 = vlaneseq
  %v2444 = vshrl.u32 %v2443, 7
  %v2445 = vsub.s32 0, %v2444
  %v2446 = vrot.slane %v2441, %v2445
  %2448 = vmatprep.subr.mxu0 0.0
  %2449 = vmatpush1.msra.mxu0 %v2440
  %2450 = vmatprep.subr.mxu0 0.0
  %2451 = vmatpush1.msra.mxu0 %v2439
  %2452 = vmatprep.subr.mxu0 0.0
  %2453 = vmatpush1.msra.mxu0 %v2438
  %2454 = vmatprep.subr.mxu0 0.0
  %2455 = vmatpush1.msra.mxu0 %v2437
  %2456 = vmatprep.subr.mxu0 0.0
  %2457 = vmatpush1.msra.mxu0 %v2436
  %2458 = vmatprep.subr.mxu0 0.0
  %2459 = vmatpush1.msra.mxu0 %v2435
  %2460 = vmatprep.subr.mxu0 0.0
  %2461 = vmatpush1.msra.mxu0 %v2434
  %2462 = vmatprep.subr.mxu0 0.0
  %2463 = vmatpush1.msra.mxu0 %v2433
  %2464 = vmatprep.subr.mxu0 0.0
  %2465 = vmatpush1.msra.mxu0 %v2432
  %2466 = vmatprep.subr.mxu0 0.0
  %2467 = vmatpush1.msra.mxu0 %v2431
  %2468 = vmatprep.subr.mxu0 0.0
  %2469 = vmatpush1.msra.mxu0 %v2430
  %2470 = vmatprep.subr.mxu0 0.0
  %2471 = vmatpush1.msra.mxu0 %v2429
  %2472 = vmatprep.subr.mxu0 0.0
  %2473 = vmatpush1.msra.mxu0 %v2428
  %2474 = vmatprep.subr.mxu0 0.0
  %2475 = vmatpush1.msra.mxu0 %v2427
  %2476 = vmatprep.subr.mxu0 0.0
  %2477 = vmatpush1.msra.mxu0 %v2426
  %2478 = vmatprep.subr.mxu0 0.0
  %2479 = vmatpush1.msra.mxu0 %v2425
  %2480 = vmatprep.subr.mxu0 0.0
  %2481 = vmatpush2.msra.mxu0 0.0
  %2482 = vmatprep.subr.mxu0 0.0
  %2483 = vmatpush2.msra.mxu0 0.0
  %2484 = vmatprep.subr.mxu0 0.0
  %2485 = vmatpush2.msra.mxu0 0.0
  %2486 = vmatprep.subr.mxu0 0.0
  %2487 = vmatpush2.msra.mxu0 0.0
  %2488 = vmatprep.subr.mxu0 0.0
  %2489 = vmatpush2.msra.mxu0 0.0
  %2490 = vmatprep.subr.mxu0 0.0
  %2491 = vmatpush2.msra.mxu0 0.0
  %2492 = vmatprep.subr.mxu0 0.0
  %2493 = vmatpush2.msra.mxu0 0.0
  %2494 = vmatprep.subr.mxu0 0.0
  %2495 = vmatpush2.msra.mxu0 0.0
  %2496 = vmatprep.subr.mxu0 0.0
  %2497 = vmatpush2.msra.mxu0 0.0
  %2498 = vmatprep.subr.mxu0 0.0
  %2499 = vmatpush2.msra.mxu0 0.0
  %2500 = vmatprep.subr.mxu0 0.0
  %2501 = vmatpush2.msra.mxu0 0.0
  %2502 = vmatprep.subr.mxu0 0.0
  %2503 = vmatpush2.msra.mxu0 0.0
  %2504 = vmatprep.subr.mxu0 0.0
  %2505 = vmatpush2.msra.mxu0 0.0
  %2506 = vmatprep.subr.mxu0 0.0
  %2507 = vmatpush2.msra.mxu0 0.0
  %2508 = vmatprep.subr.mxu0 0.0
  %2509 = vmatpush2.msra.mxu0 0.0
  %2510 = vmatprep.subr.mxu0 0.0
  %2511 = vmatpush2.msra.mxu0 0.0
  %2512 = vmatprep.mubr.f32.mxu0 0.0
  %2513 = vmatmul.mubr.f32.gmra.mxu0 %v2377
  %v2514 = vpop.f32.mrf.mxu0
  %v2515 = vadd.f32 %v2446, %v2514
  %v2516 = vpop.f32.mrf.mxu0
  %2517 = vmatprep.mubr.f32.mxu0 0.0
  %2518 = vmatmul.mubr.f32.gmra.mxu0 %v2378
  %v2519 = vpop.f32.mrf.mxu0
  %v2520 = vadd.f32 %v2446, %v2519
  %v2521 = vpop.f32.mrf.mxu0
  %2522 = vmatprep.mubr.f32.mxu0 0.0
  %2523 = vmatmul.mubr.f32.gmra.mxu0 %v2379
  %v2524 = vpop.f32.mrf.mxu0
  %v2525 = vadd.f32 %v2446, %v2524
  %v2526 = vpop.f32.mrf.mxu0
  %2527 = vmatprep.mubr.f32.mxu0 0.0
  %2528 = vmatmul.mubr.f32.gmra.mxu0 %v2380
  %v2529 = vpop.f32.mrf.mxu0
  %v2530 = vadd.f32 %v2446, %v2529
  %v2531 = vpop.f32.mrf.mxu0
  %2532 = vmatprep.mubr.f32.mxu0 0.0
  %2533 = vmatmul.mubr.f32.gmra.mxu0 %v2381
  %v2534 = vpop.f32.mrf.mxu0
  %v2535 = vadd.f32 %v2446, %v2534
  %v2536 = vpop.f32.mrf.mxu0
  %2537 = vmatprep.mubr.f32.mxu0 0.0
  %2538 = vmatmul.mubr.f32.gmra.mxu0 %v2382
  %v2539 = vpop.f32.mrf.mxu0
  %v2540 = vadd.f32 %v2446, %v2539
  %v2541 = vpop.f32.mrf.mxu0
  %2542 = vmatprep.mubr.f32.mxu0 0.0
  %2543 = vmatmul.mubr.f32.gmra.mxu0 %v2383
  %v2544 = vpop.f32.mrf.mxu0
  %v2545 = vadd.f32 %v2446, %v2544
  %v2546 = vpop.f32.mrf.mxu0
  %2547 = vmatprep.mubr.f32.mxu0 0.0
  %2548 = vmatmul.mubr.f32.gmra.mxu0 %v2384
  %v2549 = vpop.f32.mrf.mxu0
  %v2550 = vadd.f32 %v2446, %v2549
  %v2551 = vpop.f32.mrf.mxu0
  %2552 = vmatprep.mubr.f32.mxu0 0.0
  %2553 = vmatmul.mubr.f32.gmra.mxu0 %v2385
  %v2554 = vpop.f32.mrf.mxu0
  %v2555 = vadd.f32 %v2446, %v2554
  %v2556 = vpop.f32.mrf.mxu0
  %2557 = vmatprep.mubr.f32.mxu0 0.0
  %2558 = vmatmul.mubr.f32.gmra.mxu0 %v2386
  %v2559 = vpop.f32.mrf.mxu0
  %v2560 = vadd.f32 %v2446, %v2559
  %v2561 = vpop.f32.mrf.mxu0
  %2562 = vmatprep.mubr.f32.mxu0 0.0
  %2563 = vmatmul.mubr.f32.gmra.mxu0 %v2387
  %v2564 = vpop.f32.mrf.mxu0
  %v2565 = vadd.f32 %v2446, %v2564
  %v2566 = vpop.f32.mrf.mxu0
  %2567 = vmatprep.mubr.f32.mxu0 0.0
  %2568 = vmatmul.mubr.f32.gmra.mxu0 %v2388
  %v2569 = vpop.f32.mrf.mxu0
  %v2570 = vadd.f32 %v2446, %v2569
  %v2571 = vpop.f32.mrf.mxu0
  %2572 = vmatprep.mubr.f32.mxu0 0.0
  %2573 = vmatmul.mubr.f32.gmra.mxu0 %v2389
  %v2574 = vpop.f32.mrf.mxu0
  %v2575 = vadd.f32 %v2446, %v2574
  %v2576 = vpop.f32.mrf.mxu0
  %2577 = vmatprep.mubr.f32.mxu0 0.0
  %2578 = vmatmul.mubr.f32.gmra.mxu0 %v2390
  %v2579 = vpop.f32.mrf.mxu0
  %v2580 = vadd.f32 %v2446, %v2579
  %v2581 = vpop.f32.mrf.mxu0
  %2582 = vmatprep.mubr.f32.mxu0 0.0
  %2583 = vmatmul.mubr.f32.gmra.mxu0 %v2391
  %v2584 = vpop.f32.mrf.mxu0
  %v2585 = vadd.f32 %v2446, %v2584
  %v2586 = vpop.f32.mrf.mxu0
  %2587 = vmatprep.mubr.f32.mxu0 0.0
  %2588 = vmatmul.mubr.f32.gmra.mxu0 %v2392
  %v2589 = vpop.f32.mrf.mxu0
  %v2590 = vadd.f32 %v2446, %v2589
  %v2591 = vpop.f32.mrf.mxu0
  %2592 = vmatprep.mubr.f32.mxu0 0.0
  %2593 = vmatmul.mubr.f32.gmra.mxu0 %v2393
  %v2594 = vpop.f32.mrf.mxu0
  %v2595 = vadd.f32 %v2446, %v2594
  %v2596 = vpop.f32.mrf.mxu0
  %2597 = vmatprep.mubr.f32.mxu0 0.0
  %2598 = vmatmul.mubr.f32.gmra.mxu0 %v2394
  %v2599 = vpop.f32.mrf.mxu0
  %v2600 = vadd.f32 %v2446, %v2599
  %v2601 = vpop.f32.mrf.mxu0
  %2602 = vmatprep.mubr.f32.mxu0 0.0
  %2603 = vmatmul.mubr.f32.gmra.mxu0 %v2395
  %v2604 = vpop.f32.mrf.mxu0
  %v2605 = vadd.f32 %v2446, %v2604
  %v2606 = vpop.f32.mrf.mxu0
  %2607 = vmatprep.mubr.f32.mxu0 0.0
  %2608 = vmatmul.mubr.f32.gmra.mxu0 %v2396
  %v2609 = vpop.f32.mrf.mxu0
  %v2610 = vadd.f32 %v2446, %v2609
  %v2611 = vpop.f32.mrf.mxu0
  %2612 = vmatprep.mubr.f32.mxu0 0.0
  %2613 = vmatmul.mubr.f32.gmra.mxu0 %v2397
  %v2614 = vpop.f32.mrf.mxu0
  %v2615 = vadd.f32 %v2446, %v2614
  %v2616 = vpop.f32.mrf.mxu0
  %2617 = vmatprep.mubr.f32.mxu0 0.0
  %2618 = vmatmul.mubr.f32.gmra.mxu0 %v2398
  %v2619 = vpop.f32.mrf.mxu0
  %v2620 = vadd.f32 %v2446, %v2619
  %v2621 = vpop.f32.mrf.mxu0
  %2622 = vmatprep.mubr.f32.mxu0 0.0
  %2623 = vmatmul.mubr.f32.gmra.mxu0 %v2399
  %v2624 = vpop.f32.mrf.mxu0
  %v2625 = vadd.f32 %v2446, %v2624
  %v2626 = vpop.f32.mrf.mxu0
  %2627 = vmatprep.mubr.f32.mxu0 0.0
  %2628 = vmatmul.mubr.f32.gmra.mxu0 %v2400
  %v2629 = vpop.f32.mrf.mxu0
  %v2630 = vadd.f32 %v2446, %v2629
  %v2631 = vpop.f32.mrf.mxu0
  %2632 = vmatprep.mubr.f32.mxu0 0.0
  %2633 = vmatmul.mubr.f32.gmra.mxu0 %v2401
  %v2634 = vpop.f32.mrf.mxu0
  %v2635 = vadd.f32 %v2446, %v2634
  %v2636 = vpop.f32.mrf.mxu0
  %2637 = vmatprep.mubr.f32.mxu0 0.0
  %2638 = vmatmul.mubr.f32.gmra.mxu0 %v2402
  %v2639 = vpop.f32.mrf.mxu0
  %v2640 = vadd.f32 %v2446, %v2639
  %v2641 = vpop.f32.mrf.mxu0
  %2642 = vmatprep.mubr.f32.mxu0 0.0
  %2643 = vmatmul.mubr.f32.gmra.mxu0 %v2403
  %v2644 = vpop.f32.mrf.mxu0
  %v2645 = vadd.f32 %v2446, %v2644
  %v2646 = vpop.f32.mrf.mxu0
  %2647 = vmatprep.mubr.f32.mxu0 0.0
  %2648 = vmatmul.mubr.f32.gmra.mxu0 %v2404
  %v2649 = vpop.f32.mrf.mxu0
  %v2650 = vadd.f32 %v2446, %v2649
  %v2651 = vpop.f32.mrf.mxu0
  %2652 = vmatprep.mubr.f32.mxu0 0.0
  %2653 = vmatmul.mubr.f32.gmra.mxu0 %v2405
  %v2654 = vpop.f32.mrf.mxu0
  %v2655 = vadd.f32 %v2446, %v2654
  %v2656 = vpop.f32.mrf.mxu0
  %2657 = vmatprep.mubr.f32.mxu0 0.0
  %2658 = vmatmul.mubr.f32.gmra.mxu0 %v2406
  %v2659 = vpop.f32.mrf.mxu0
  %v2660 = vadd.f32 %v2446, %v2659
  %v2661 = vpop.f32.mrf.mxu0
  %2662 = vmatprep.mubr.f32.mxu0 0.0
  %2663 = vmatmul.mubr.f32.gmra.mxu0 %v2407
  %v2664 = vpop.f32.mrf.mxu0
  %v2665 = vadd.f32 %v2446, %v2664
  %v2666 = vpop.f32.mrf.mxu0
  %2667 = vmatprep.mubr.f32.mxu0 0.0
  %2668 = vmatmul.mubr.f32.gmra.mxu0 %v2408
  %v2669 = vpop.f32.mrf.mxu0
  %v2670 = vadd.f32 %v2446, %v2669
  %v2671 = vpop.f32.mrf.mxu0
  %2672 = vmatprep.mubr.f32.mxu0 0.0
  %2673 = vmatmul.mubr.f32.gmra.mxu0 %v2409
  %v2674 = vpop.f32.mrf.mxu0
  %v2675 = vadd.f32 %v2446, %v2674
  %v2676 = vpop.f32.mrf.mxu0
  %2677 = vmatprep.mubr.f32.mxu0 0.0
  %2678 = vmatmul.mubr.f32.gmra.mxu0 %v2410
  %v2679 = vpop.f32.mrf.mxu0
  %v2680 = vadd.f32 %v2446, %v2679
  %v2681 = vpop.f32.mrf.mxu0
  %2682 = vmatprep.mubr.f32.mxu0 0.0
  %2683 = vmatmul.mubr.f32.gmra.mxu0 %v2411
  %v2684 = vpop.f32.mrf.mxu0
  %v2685 = vadd.f32 %v2446, %v2684
  %v2686 = vpop.f32.mrf.mxu0
  %2687 = vmatprep.mubr.f32.mxu0 0.0
  %2688 = vmatmul.mubr.f32.gmra.mxu0 %v2412
  %v2689 = vpop.f32.mrf.mxu0
  %v2690 = vadd.f32 %v2446, %v2689
  %v2691 = vpop.f32.mrf.mxu0
  %2692 = vmatprep.mubr.f32.mxu0 0.0
  %2693 = vmatmul.mubr.f32.gmra.mxu0 %v2413
  %v2694 = vpop.f32.mrf.mxu0
  %v2695 = vadd.f32 %v2446, %v2694
  %v2696 = vpop.f32.mrf.mxu0
  %2697 = vmatprep.mubr.f32.mxu0 0.0
  %2698 = vmatmul.mubr.f32.gmra.mxu0 %v2414
  %v2699 = vpop.f32.mrf.mxu0
  %v2700 = vadd.f32 %v2446, %v2699
  %v2701 = vpop.f32.mrf.mxu0
  %2702 = vmatprep.mubr.f32.mxu0 0.0
  %2703 = vmatmul.mubr.f32.gmra.mxu0 %v2415
  %v2704 = vpop.f32.mrf.mxu0
  %v2705 = vadd.f32 %v2446, %v2704
  %v2706 = vpop.f32.mrf.mxu0
  %2707 = vmatprep.mubr.f32.mxu0 0.0
  %2708 = vmatmul.mubr.f32.gmra.mxu0 %v2416
  %v2709 = vpop.f32.mrf.mxu0
  %v2710 = vadd.f32 %v2446, %v2709
  %v2711 = vpop.f32.mrf.mxu0
  %2712 = vmatprep.mubr.f32.mxu0 0.0
  %2713 = vmatmul.mubr.f32.gmra.mxu0 %v2417
  %v2714 = vpop.f32.mrf.mxu0
  %v2715 = vadd.f32 %v2446, %v2714
  %v2716 = vpop.f32.mrf.mxu0
  %2717 = vmatprep.mubr.f32.mxu0 0.0
  %2718 = vmatmul.mubr.f32.gmra.mxu0 %v2418
  %v2719 = vpop.f32.mrf.mxu0
  %v2720 = vadd.f32 %v2446, %v2719
  %v2721 = vpop.f32.mrf.mxu0
  %2722 = vmatprep.mubr.f32.mxu0 0.0
  %2723 = vmatmul.mubr.f32.gmra.mxu0 %v2419
  %v2724 = vpop.f32.mrf.mxu0
  %v2725 = vadd.f32 %v2446, %v2724
  %v2726 = vpop.f32.mrf.mxu0
  %2727 = vmatprep.mubr.f32.mxu0 0.0
  %2728 = vmatmul.mubr.f32.gmra.mxu0 %v2420
  %v2729 = vpop.f32.mrf.mxu0
  %v2730 = vadd.f32 %v2446, %v2729
  %v2731 = vpop.f32.mrf.mxu0
  %2732 = vmatprep.mubr.f32.mxu0 0.0
  %2733 = vmatmul.mubr.f32.gmra.mxu0 %v2421
  %v2734 = vpop.f32.mrf.mxu0
  %v2735 = vadd.f32 %v2446, %v2734
  %v2736 = vpop.f32.mrf.mxu0
  %2737 = vmatprep.mubr.f32.mxu0 0.0
  %2738 = vmatmul.mubr.f32.gmra.mxu0 %v2422
  %v2739 = vpop.f32.mrf.mxu0
  %v2740 = vadd.f32 %v2446, %v2739
  %v2741 = vpop.f32.mrf.mxu0
  %2742 = vmatprep.mubr.f32.mxu0 0.0
  %2743 = vmatmul.mubr.f32.gmra.mxu0 %v2423
  %v2744 = vpop.f32.mrf.mxu0
  %v2745 = vadd.f32 %v2446, %v2744
  %v2746 = vpop.f32.mrf.mxu0
  %2747 = vmatprep.mubr.f32.mxu0 0.0
  %2748 = vmatmul.mubr.f32.gmra.mxu0 %v2424
  %v2749 = vpop.f32.mrf.mxu0
  %v2750 = vadd.f32 %v2446, %v2749
  %v2751 = vpop.f32.mrf.mxu0
  %2752 = vdwg.mxu0
  %2753 = vst [vmem:[%s3] sm:$0xff] %v2515
  %2754 = vst [vmem:[%s3 + $0x8] sm:$0xff] %v2520
  %2755 = vst [vmem:[%s3 + $0x10] sm:$0xff] %v2525
  %2756 = vst [vmem:[%s3 + $0x18] sm:$0xff] %v2530
  %2757 = vst [vmem:[%s3 + $0x20] sm:$0xff] %v2535
  %2758 = vst [vmem:[%s3 + $0x28] sm:$0xff] %v2540
  %2759 = vst [vmem:[%s3 + $0x30] sm:$0xff] %v2545
  %2760 = vst [vmem:[%s3 + $0x38] sm:$0xff] %v2550
  %2761 = vst [vmem:[%s3 + $0x40] sm:$0xff] %v2555
  %2762 = vst [vmem:[%s3 + $0x48] sm:$0xff] %v2560
  %2763 = vst [vmem:[%s3 + $0x50] sm:$0xff] %v2565
  %2764 = vst [vmem:[%s3 + $0x58] sm:$0xff] %v2570
  %2765 = vst [vmem:[%s3 + $0x60] sm:$0xff] %v2575
  %2766 = vst [vmem:[%s3 + $0x68] sm:$0xff] %v2580
  %2767 = vst [vmem:[%s3 + $0x70] sm:$0xff] %v2585
  %2768 = vst [vmem:[%s3 + $0x78] sm:$0xff] %v2590
  %2769 = vst [vmem:[%s3 + $0x80] sm:$0xff] %v2595
  %2770 = vst [vmem:[%s3 + $0x88] sm:$0xff] %v2600
  %2771 = vst [vmem:[%s3 + $0x90] sm:$0xff] %v2605
  %2772 = vst [vmem:[%s3 + $0x98] sm:$0xff] %v2610
  %2773 = vst [vmem:[%s3 + $0xa0] sm:$0xff] %v2615
  %2774 = vst [vmem:[%s3 + $0xa8] sm:$0xff] %v2620
  %2775 = vst [vmem:[%s3 + $0xb0] sm:$0xff] %v2625
  %2776 = vst [vmem:[%s3 + $0xb8] sm:$0xff] %v2630
  %2777 = vst [vmem:[%s3 + $0xc0] sm:$0xff] %v2635
  %2778 = vst [vmem:[%s3 + $0xc8] sm:$0xff] %v2640
  %2779 = vst [vmem:[%s3 + $0xd0] sm:$0xff] %v2645
  %2780 = vst [vmem:[%s3 + $0xd8] sm:$0xff] %v2650
  %2781 = vst [vmem:[%s3 + $0xe0] sm:$0xff] %v2655
  %2782 = vst [vmem:[%s3 + $0xe8] sm:$0xff] %v2660
  %2783 = vst [vmem:[%s3 + $0xf0] sm:$0xff] %v2665
  %2784 = vst [vmem:[%s3 + $0xf8] sm:$0xff] %v2670
  %2785 = vst [vmem:[%s3 + $0x100] sm:$0xff] %v2675
  %2786 = vst [vmem:[%s3 + $0x108] sm:$0xff] %v2680
  %2787 = vst [vmem:[%s3 + $0x110] sm:$0xff] %v2685
  %2788 = vst [vmem:[%s3 + $0x118] sm:$0xff] %v2690
  %2789 = vst [vmem:[%s3 + $0x120] sm:$0xff] %v2695
  %2790 = vst [vmem:[%s3 + $0x128] sm:$0xff] %v2700
  %2791 = vst [vmem:[%s3 + $0x130] sm:$0xff] %v2705
  %2792 = vst [vmem:[%s3 + $0x138] sm:$0xff] %v2710
  %2793 = vst [vmem:[%s3 + $0x140] sm:$0xff] %v2715
  %2794 = vst [vmem:[%s3 + $0x148] sm:$0xff] %v2720
  %2795 = vst [vmem:[%s3 + $0x150] sm:$0xff] %v2725
  %2796 = vst [vmem:[%s3 + $0x158] sm:$0xff] %v2730
  %2797 = vst [vmem:[%s3 + $0x160] sm:$0xff] %v2735
  %2798 = vst [vmem:[%s3 + $0x168] sm:$0xff] %v2740
  %2799 = vst [vmem:[%s3 + $0x170] sm:$0xff] %v2745
  %2800 = vst [vmem:[%s3 + $0x178] sm:$0xff] %v2750
  // Predicated region
  $region14: #{conv2d_pallas.1} parent=0 // pred_check
    _
  $region15: #{conv2d_pallas.1} parent=0 // pred_check_branch
    %2802 = sbr.rel (0) target = $region17
  $region16: #{conv2d_pallas.1} parent=0 // pred_region
    _
  $region17: #{conv2d_pallas.1} parent=0 // pred_fallthru
    _
  // Predicated region
  $region18: #{conv2d_pallas.1} parent=0 // pred_check
    _
  $region19: #{conv2d_pallas.1} parent=0 // pred_check_branch
    %2804 = sbr.rel (0) target = $region21
  $region20: #{conv2d_pallas.1} parent=0 // pred_region
    _
  $region21: #{conv2d_pallas.1} parent=0 // pred_fallthru
    _

</llo_original>
